<compile_context>
chip_gen: v7x
topology: tpu7x:2x2x1
jax: 0.10.0
libtpu: 0.0.40
codegen_flags: <defaults>
</compile_context>

<pallas_src>
import numpy as np
import jax
import jax.numpy as jnp
from jax import lax
from jax.experimental import pallas as pl
from jax.experimental.pallas import tpu as pltpu

LANE = 128


def _round_up(n, m):
    return ((n + m - 1) // m) * m


def fire_kernel(x_ref, wsq_ref, bsq_ref, we1_ref, be1_ref, we3_ref, be3_ref,
                o_ref, s_pad):
    r = pl.program_id(1)
    nr = pl.num_programs(1)

    _, Hp2, W, Cin_p = x_ref.shape          # Hp2 = H + 2 (zero rows top/bottom)
    Csq_p = wsq_ref.shape[1]
    Ce_p = we1_ref.shape[1]
    TH = o_ref.shape[1] // W                # output rows per tile

    # Rows [r*TH, r*TH + TH + 2) of the H-padded input == original rows
    # [r*TH - 1, r*TH + TH + 1): the tile plus a 1-row halo on each side.
    row0 = pl.multiple_of(r * TH, TH)
    xt = x_ref[0, pl.ds(row0, TH + 2), :, :]            # (TH+2, W, Cin_p) bf16
    x2d = xt.reshape((TH + 2) * W, Cin_p)

    # ---- squeeze: 1x1 conv == channel matmul on the MXU; bias+ReLU in f32
    s = jnp.dot(x2d, wsq_ref[...], preferred_element_type=jnp.float32)
    s = jnp.maximum(s + bsq_ref[...], 0.0)              # f32
    s3 = s.reshape(TH + 2, W, Csq_p)

    # ---- expand1x1 on the interior TH rows
    s_in = s3[1:TH + 1].reshape(TH * W, Csq_p).astype(we1_ref.dtype)
    e1 = jnp.dot(s_in, we1_ref[...], preferred_element_type=jnp.float32)
    e1 = jnp.maximum(e1 + be1_ref[...], 0.0)
    o_ref[0, :, :Ce_p] = e1.astype(o_ref.dtype)         # lane-aligned slice

    # ---- expand3x3: fill a (TH+2, W+2, Csq_p) zero-padded scratch
    # (memset + interior write: no cross-iteration state, so both grid axes
    #  can be "parallel"; W borders stay zero, H borders zeroed at the image
    #  boundary because the halo there came from the zero-padded x rows and
    #  would otherwise hold relu(bias) instead of 0.)
    s_pad[...] = jnp.zeros(s_pad.shape, s_pad.dtype)
    s_pad[:, 1:W + 1, :] = s3.astype(s_pad.dtype)

    @pl.when(r == 0)
    def _():
        s_pad[0, :, :] = jnp.zeros((W + 2, Csq_p), s_pad.dtype)

    @pl.when(r == nr - 1)
    def _():
        s_pad[TH + 1, :, :] = jnp.zeros((W + 2, Csq_p), s_pad.dtype)

    # im2col: one MXU matmul with K = 9*Csq_p instead of nine K=Csq_p matmuls.
    taps = [s_pad[dy:dy + TH, dx:dx + W, :]
            for dy in range(3) for dx in range(3)]       # each (TH, W, Csq_p)
    patches = jnp.concatenate(taps, axis=-1).reshape(TH * W, 9 * Csq_p)
    e3 = jnp.dot(patches, we3_ref[...], preferred_element_type=jnp.float32)
    e3 = jnp.maximum(e3 + be3_ref[...], 0.0)
    o_ref[0, :, Ce_p:] = e3.astype(o_ref.dtype)          # lane-aligned slice


def fire_module(x, wsq, bsq, we1, be1, we3, be3, *, row_tile=None,
                mxu_dtype=jnp.bfloat16):
    """x: [N, H, W, Cin] NHWC. Returns [N, H, W, 2*expand_channels] (x.dtype)."""
    N, H, W, Cin = x.shape
    Csq = wsq.shape[1]
    Ce = we1.shape[1]
    out_dtype = x.dtype

    Cin_p = _round_up(Cin, LANE)
    Csq_p = _round_up(Csq, LANE)
    Ce_p = _round_up(Ce, LANE)

    # Row tile: VMEM use scales with TH. Pick smaller on v7x (64 MiB VMEM),
    # larger on v5e (big tiles amortize its lower HBM bandwidth).
    if row_tile is None:
        row_tile = H if H <= 8 else 8
        while H % row_tile != 0:
            row_tile -= 1
    TH = row_tile
    assert H % TH == 0, "row_tile must divide H"
    nr = H // TH

    # ---- host-side prep: H zero-halo, channel zero-padding, bf16 MXU operands
    xp = jnp.pad(x, ((0, 0), (1, 1), (0, 0), (0, Cin_p - Cin))).astype(mxu_dtype)
    wsq_p = jnp.pad(wsq, ((0, Cin_p - Cin), (0, Csq_p - Csq))).astype(mxu_dtype)
    we1_p = jnp.pad(we1, ((0, Csq_p - Csq), (0, Ce_p - Ce))).astype(mxu_dtype)
    we3_p = jnp.pad(we3, ((0, 0), (0, 0), (0, Csq_p - Csq), (0, Ce_p - Ce)))
    we3_p = we3_p.reshape(9 * Csq_p, Ce_p).astype(mxu_dtype)  # tap-major (dy*3+dx)
    bsq_p = jnp.pad(bsq, (0, Csq_p - Csq)).reshape(1, Csq_p).astype(jnp.float32)
    be1_p = jnp.pad(be1, (0, Ce_p - Ce)).reshape(1, Ce_p).astype(jnp.float32)
    be3_p = jnp.pad(be3, (0, Ce_p - Ce)).reshape(1, Ce_p).astype(jnp.float32)

    itemsize = jnp.dtype(mxu_dtype).itemsize
    flops = 2 * N * H * W * (Cin_p * Csq_p + Csq_p * Ce_p + 9 * Csq_p * Ce_p)
    bytes_accessed = (xp.size * itemsize
                      + (wsq_p.size + we1_p.size + we3_p.size) * itemsize
                      + (bsq_p.size + be1_p.size + be3_p.size) * 4
                      + N * H * W * 2 * Ce_p * jnp.dtype(out_dtype).itemsize)

    out = pl.pallas_call(
        fire_kernel,
        out_shape=jax.ShapeDtypeStruct((N, H * W, 2 * Ce_p), out_dtype),
        grid=(N, nr),
        in_specs=[
            # full (H-padded) image per batch item; constant over the row axis
            # so it is only DMA'd once per n. Kernel slices the TH+2 halo rows.
            pl.BlockSpec((1, H + 2, W, Cin_p), lambda n, r: (n, 0, 0, 0)),
            pl.BlockSpec((Cin_p, Csq_p), lambda n, r: (0, 0)),
            pl.BlockSpec((1, Csq_p), lambda n, r: (0, 0)),
            pl.BlockSpec((Csq_p, Ce_p), lambda n, r: (0, 0)),
            pl.BlockSpec((1, Ce_p), lambda n, r: (0, 0)),
            pl.BlockSpec((9 * Csq_p, Ce_p), lambda n, r: (0, 0)),
            pl.BlockSpec((1, Ce_p), lambda n, r: (0, 0)),
        ],
        out_specs=pl.BlockSpec((1, TH * W, 2 * Ce_p), lambda n, r: (n, r, 0)),
        scratch_shapes=[pltpu.VMEM((TH + 2, W + 2, Csq_p), mxu_dtype)],
        compiler_params=pltpu.CompilerParams(
            dimension_semantics=("parallel", "parallel")),
        cost_estimate=pl.CostEstimate(flops=flops, transcendentals=0,
                                      bytes_accessed=bytes_accessed),
    )(xp, wsq_p, bsq_p, we1_p, be1_p, we3_p, be3_p)

    out = out.reshape(N, H, W, 2 * Ce_p)
    # drop padded channels; expand1x1 block first, then expand3x3 (torch.cat order)
    return jnp.concatenate([out[..., :Ce], out[..., Ce_p:Ce_p + Ce]], axis=-1)


def fire_ref(x, wsq, bsq, we1, be1, we3, be3):
    """Pure-JAX f32 reference (NHWC convs)."""
    dn = ("NHWC", "HWIO", "NHWC")
    Cin, Csq = wsq.shape
    Ce = we1.shape[1]
    s = lax.conv_general_dilated(x, wsq.reshape(1, 1, Cin, Csq), (1, 1), "SAME",
                                 dimension_numbers=dn) + bsq
    s = jax.nn.relu(s)
    e1 = lax.conv_general_dilated(s, we1.reshape(1, 1, Csq, Ce), (1, 1), "SAME",
                                  dimension_numbers=dn) + be1
    e3 = lax.conv_general_dilated(s, we3, (1, 1), "SAME",
                                  dimension_numbers=dn) + be3
    return jax.nn.relu(jnp.concatenate([e1, e3], axis=-1))


if __name__ == "__main__":
    # small shapes consistent with FireModule(in_channels=4, squeeze=8, expand=16)
    N, H, W = 2, 16, 16
    Cin, Csq, Ce = 4, 8, 16

    key = jax.random.PRNGKey(0)
    kx, k1, k2, k3, k4, k5, k6 = jax.random.split(key, 7)

    x = jax.random.normal(kx, (N, H, W, Cin), dtype=jnp.float32)
    wsq = jax.random.normal(k1, (Cin, Csq), dtype=jnp.float32) * 0.1
    bsq = jax.random.normal(k2, (Csq,), dtype=jnp.float32) * 0.1
    we1 = jax.random.normal(k3, (Csq, Ce), dtype=jnp.float32) * 0.1
    be1 = jax.random.normal(k4, (Ce,), dtype=jnp.float32) * 0.1
    we3 = jax.random.normal(k5, (3, 3, Csq, Ce), dtype=jnp.float32) * 0.1
    be3 = jax.random.normal(k6, (Ce,), dtype=jnp.float32) * 0.1

    out = fire_module(x, wsq, bsq, we1, be1, we3, be3)
    out = jax.block_until_ready(out)

    ref = fire_ref(x, wsq, bsq, we1, be1, we3, be3)
    # bf16 MXU operands (f32 accumulation) -> compare with bf16-level tolerance
    np.testing.assert_allclose(np.asarray(out), np.asarray(ref),
                               rtol=2e-2, atol=2e-2)

    print("KERNEL_OK")
</pallas_src>

<mosaic_0001>
module attributes {stable_mosaic.version = 11 : i64} {
  func.func @fire_kernel(%arg0: i32, %arg1: i32, %arg2: memref<1x18x16x128xbf16, #tpu.memory_space<vmem>>, %arg3: memref<128x128xbf16, #tpu.memory_space<vmem>>, %arg4: memref<1x128xf32, #tpu.memory_space<vmem>>, %arg5: memref<128x128xbf16, #tpu.memory_space<vmem>>, %arg6: memref<1x128xf32, #tpu.memory_space<vmem>>, %arg7: memref<1152x128xbf16, #tpu.memory_space<vmem>>, %arg8: memref<1x128xf32, #tpu.memory_space<vmem>>, %arg9: memref<1x128x256xf32, #tpu.memory_space<vmem>>, %arg10: memref<10x18x128xbf16, #tpu.memory_space<vmem>>) attributes {dimension_semantics = [#tpu.dimension_semantics<parallel>, #tpu.dimension_semantics<parallel>], iteration_bounds = array<i64: 2, 2>, scalar_prefetch = 0 : i64, scratch_operands = 1 : i64, tpu.core_type = #tpu.core_type<tc>, window_params = [{transform_indices = @transform_0, window_bounds = array<i64: 1, 18, 16, 128>}, {pipeline_mode = #tpu.pipeline_mode<synchronous>, transform_indices = @transform_1, window_bounds = array<i64: 128, 128>}, {pipeline_mode = #tpu.pipeline_mode<synchronous>, transform_indices = @transform_2, window_bounds = array<i64: 1, 128>}, {pipeline_mode = #tpu.pipeline_mode<synchronous>, transform_indices = @transform_3, window_bounds = array<i64: 128, 128>}, {pipeline_mode = #tpu.pipeline_mode<synchronous>, transform_indices = @transform_4, window_bounds = array<i64: 1, 128>}, {pipeline_mode = #tpu.pipeline_mode<synchronous>, transform_indices = @transform_5, window_bounds = array<i64: 1152, 128>}, {pipeline_mode = #tpu.pipeline_mode<synchronous>, transform_indices = @transform_6, window_bounds = array<i64: 1, 128>}, {transform_indices = @transform_7, window_bounds = array<i64: 1, 128, 256>}]} {
    %c8_i32 = arith.constant 8 : i32
    %0 = arith.muli %arg1, %c8_i32 : i32
    %1 = tpu.assume_multiple %0, 8 : i32
    %c0 = arith.constant 0 : index
    %2 = arith.index_cast %1 : i32 to index
    %c0_0 = arith.constant 0 : index
    %c0_1 = arith.constant 0 : index
    %3 = vector.load %arg2[%c0, %2, %c0_0, %c0_1] : memref<1x18x16x128xbf16, #tpu.memory_space<vmem>>, vector<1x10x16x128xbf16>
    %4 = vector.shape_cast %3 : vector<1x10x16x128xbf16> to vector<10x16x128xbf16>
    %5 = vector.shape_cast %4 : vector<10x16x128xbf16> to vector<160x128xbf16>
    %c0_2 = arith.constant 0 : index
    %c0_3 = arith.constant 0 : index
    %6 = vector.load %arg3[%c0_2, %c0_3] : memref<128x128xbf16, #tpu.memory_space<vmem>>, vector<128x128xbf16>
    %cst = arith.constant dense<0.000000e+00> : vector<160x128xf32>
    %7 = tpu.matmul %5, %6, %cst {dimension_numbers = #tpu.dot_dimension_numbers<[1], [0], [0], [1], [0, 0, 1, 1], [], []>} : vector<160x128xbf16>, vector<128x128xbf16>, vector<160x128xf32> -> vector<160x128xf32>
    %c0_4 = arith.constant 0 : index
    %c0_5 = arith.constant 0 : index
    %8 = vector.load %arg4[%c0_4, %c0_5] : memref<1x128xf32, #tpu.memory_space<vmem>>, vector<1x128xf32>
    %9 = vector.broadcast %8 : vector<1x128xf32> to vector<160x128xf32>
    %10 = arith.addf %7, %9 : vector<160x128xf32>
    %cst_6 = arith.constant 0.000000e+00 : f32
    %11 = vector.broadcast %cst_6 : f32 to vector<160x128xf32>
    %12 = arith.maximumf %10, %11 : vector<160x128xf32>
    %13 = vector.shape_cast %12 : vector<160x128xf32> to vector<10x16x128xf32>
    %14 = vector.extract_strided_slice %13 {offsets = [1, 0, 0], sizes = [8, 16, 128], strides = [1, 1, 1]} : vector<10x16x128xf32> to vector<8x16x128xf32>
    %15 = vector.shape_cast %14 : vector<8x16x128xf32> to vector<128x128xf32>
    %16 = arith.truncf %15 : vector<128x128xf32> to vector<128x128xbf16>
    %c0_7 = arith.constant 0 : index
    %c0_8 = arith.constant 0 : index
    %17 = vector.load %arg5[%c0_7, %c0_8] : memref<128x128xbf16, #tpu.memory_space<vmem>>, vector<128x128xbf16>
    %cst_9 = arith.constant dense<0.000000e+00> : vector<128x128xf32>
    %18 = tpu.matmul %16, %17, %cst_9 {dimension_numbers = #tpu.dot_dimension_numbers<[1], [0], [0], [1], [0, 0, 1, 1], [], []>} : vector<128x128xbf16>, vector<128x128xbf16>, vector<128x128xf32> -> vector<128x128xf32>
    %c0_10 = arith.constant 0 : index
    %c0_11 = arith.constant 0 : index
    %19 = vector.load %arg6[%c0_10, %c0_11] : memref<1x128xf32, #tpu.memory_space<vmem>>, vector<1x128xf32>
    %20 = vector.broadcast %19 : vector<1x128xf32> to vector<128x128xf32>
    %21 = arith.addf %18, %20 : vector<128x128xf32>
    %cst_12 = arith.constant 0.000000e+00 : f32
    %22 = vector.broadcast %cst_12 : f32 to vector<128x128xf32>
    %23 = arith.maximumf %21, %22 : vector<128x128xf32>
    %c0_13 = arith.constant 0 : index
    %c0_14 = arith.constant 0 : index
    %c0_15 = arith.constant 0 : index
    %24 = vector.load %arg9[%c0_13, %c0_14, %c0_15] : memref<1x128x256xf32, #tpu.memory_space<vmem>>, vector<1x128x128xf32>
    %25 = vector.shape_cast %24 : vector<1x128x128xf32> to vector<128x128xf32>
    %26 = vector.shape_cast %23 : vector<128x128xf32> to vector<1x128x128xf32>
    tpu.vector_store %arg9[%c0_13, %c0_14, %c0_15], %26 {strides = array<i32>} : memref<1x128x256xf32, #tpu.memory_space<vmem>>, vector<1x128x128xf32>,
    %cst_16 = arith.constant 0.000000e+00 : bf16
    %27 = vector.broadcast %cst_16 : bf16 to vector<10x18x128xbf16>
    %c0_17 = arith.constant 0 : index
    %c0_18 = arith.constant 0 : index
    %c0_19 = arith.constant 0 : index
    %28 = vector.load %arg10[%c0_17, %c0_18, %c0_19] : memref<10x18x128xbf16, #tpu.memory_space<vmem>>, vector<10x18x128xbf16>
    tpu.vector_store %arg10[%c0_17, %c0_18, %c0_19], %27 {strides = array<i32>} : memref<10x18x128xbf16, #tpu.memory_space<vmem>>, vector<10x18x128xbf16>,
    %29 = arith.truncf %13 : vector<10x16x128xf32> to vector<10x16x128xbf16>
    %c0_20 = arith.constant 0 : index
    %c1 = arith.constant 1 : index
    %c0_21 = arith.constant 0 : index
    %30 = vector.load %arg10[%c0_20, %c1, %c0_21] : memref<10x18x128xbf16, #tpu.memory_space<vmem>>, vector<10x16x128xbf16>
    tpu.vector_store %arg10[%c0_20, %c1, %c0_21], %29 {strides = array<i32>} : memref<10x18x128xbf16, #tpu.memory_space<vmem>>, vector<10x16x128xbf16>,
    %c0_i32 = arith.constant 0 : i32
    %31 = arith.cmpi eq, %arg1, %c0_i32 : i32
    %32 = arith.extui %31 : i1 to i32
    %c0_i32_22 = arith.constant 0 : i32
    %33 = arith.cmpi ne, %32, %c0_i32_22 : i32
    scf.if %33 {
      %cst_58 = arith.constant 0.000000e+00 : bf16
      %58 = vector.broadcast %cst_58 : bf16 to vector<18x128xbf16>
      %c0_59 = arith.constant 0 : index
      %c0_60 = arith.constant 0 : index
      %c0_61 = arith.constant 0 : index
      %59 = vector.load %arg10[%c0_59, %c0_60, %c0_61] : memref<10x18x128xbf16, #tpu.memory_space<vmem>>, vector<1x18x128xbf16>
      %60 = vector.shape_cast %59 : vector<1x18x128xbf16> to vector<18x128xbf16>
      %61 = vector.shape_cast %58 : vector<18x128xbf16> to vector<1x18x128xbf16>
      tpu.vector_store %arg10[%c0_59, %c0_60, %c0_61], %61 {strides = array<i32>} : memref<10x18x128xbf16, #tpu.memory_space<vmem>>, vector<1x18x128xbf16>,
    } else {
    }
    %c1_i32 = arith.constant 1 : i32
    %34 = arith.cmpi eq, %arg1, %c1_i32 : i32
    %35 = arith.extui %34 : i1 to i32
    %c0_i32_23 = arith.constant 0 : i32
    %36 = arith.cmpi ne, %35, %c0_i32_23 : i32
    scf.if %36 {
      %cst_58 = arith.constant 0.000000e+00 : bf16
      %58 = vector.broadcast %cst_58 : bf16 to vector<18x128xbf16>
      %c9 = arith.constant 9 : index
      %c0_59 = arith.constant 0 : index
      %c0_60 = arith.constant 0 : index
      %59 = vector.load %arg10[%c9, %c0_59, %c0_60] : memref<10x18x128xbf16, #tpu.memory_space<vmem>>, vector<1x18x128xbf16>
      %60 = vector.shape_cast %59 : vector<1x18x128xbf16> to vector<18x128xbf16>
      %61 = vector.shape_cast %58 : vector<18x128xbf16> to vector<1x18x128xbf16>
      tpu.vector_store %arg10[%c9, %c0_59, %c0_60], %61 {strides = array<i32>} : memref<10x18x128xbf16, #tpu.memory_space<vmem>>, vector<1x18x128xbf16>,
    } else {
    }
    %c0_24 = arith.constant 0 : index
    %c0_25 = arith.constant 0 : index
    %c0_26 = arith.constant 0 : index
    %37 = vector.load %arg10[%c0_24, %c0_25, %c0_26] : memref<10x18x128xbf16, #tpu.memory_space<vmem>>, vector<8x16x128xbf16>
    %c0_27 = arith.constant 0 : index
    %c1_28 = arith.constant 1 : index
    %c0_29 = arith.constant 0 : index
    %38 = vector.load %arg10[%c0_27, %c1_28, %c0_29] : memref<10x18x128xbf16, #tpu.memory_space<vmem>>, vector<8x16x128xbf16>
    %c0_30 = arith.constant 0 : index
    %c2 = arith.constant 2 : index
    %c0_31 = arith.constant 0 : index
    %39 = vector.load %arg10[%c0_30, %c2, %c0_31] : memref<10x18x128xbf16, #tpu.memory_space<vmem>>, vector<8x16x128xbf16>
    %c1_32 = arith.constant 1 : index
    %c0_33 = arith.constant 0 : index
    %c0_34 = arith.constant 0 : index
    %40 = vector.load %arg10[%c1_32, %c0_33, %c0_34] : memref<10x18x128xbf16, #tpu.memory_space<vmem>>, vector<8x16x128xbf16>
    %c1_35 = arith.constant 1 : index
    %c1_36 = arith.constant 1 : index
    %c0_37 = arith.constant 0 : index
    %41 = vector.load %arg10[%c1_35, %c1_36, %c0_37] : memref<10x18x128xbf16, #tpu.memory_space<vmem>>, vector<8x16x128xbf16>
    %c1_38 = arith.constant 1 : index
    %c2_39 = arith.constant 2 : index
    %c0_40 = arith.constant 0 : index
    %42 = vector.load %arg10[%c1_38, %c2_39, %c0_40] : memref<10x18x128xbf16, #tpu.memory_space<vmem>>, vector<8x16x128xbf16>
    %c2_41 = arith.constant 2 : index
    %c0_42 = arith.constant 0 : index
    %c0_43 = arith.constant 0 : index
    %43 = vector.load %arg10[%c2_41, %c0_42, %c0_43] : memref<10x18x128xbf16, #tpu.memory_space<vmem>>, vector<8x16x128xbf16>
    %c2_44 = arith.constant 2 : index
    %c1_45 = arith.constant 1 : index
    %c0_46 = arith.constant 0 : index
    %44 = vector.load %arg10[%c2_44, %c1_45, %c0_46] : memref<10x18x128xbf16, #tpu.memory_space<vmem>>, vector<8x16x128xbf16>
    %c2_47 = arith.constant 2 : index
    %c2_48 = arith.constant 2 : index
    %c0_49 = arith.constant 0 : index
    %45 = vector.load %arg10[%c2_47, %c2_48, %c0_49] : memref<10x18x128xbf16, #tpu.memory_space<vmem>>, vector<8x16x128xbf16>
    %46 = tpu.concatenate %37, %38, %39, %40, %41, %42, %43, %44, %45 in 2 : vector<8x16x128xbf16>, vector<8x16x128xbf16>, vector<8x16x128xbf16>, vector<8x16x128xbf16>, vector<8x16x128xbf16>, vector<8x16x128xbf16>, vector<8x16x128xbf16>, vector<8x16x128xbf16>, vector<8x16x128xbf16> -> vector<8x16x1152xbf16>
    %47 = vector.shape_cast %46 : vector<8x16x1152xbf16> to vector<128x1152xbf16>
    %c0_50 = arith.constant 0 : index
    %c0_51 = arith.constant 0 : index
    %48 = vector.load %arg7[%c0_50, %c0_51] : memref<1152x128xbf16, #tpu.memory_space<vmem>>, vector<1152x128xbf16>
    %cst_52 = arith.constant dense<0.000000e+00> : vector<128x128xf32>
    %49 = tpu.matmul %47, %48, %cst_52 {dimension_numbers = #tpu.dot_dimension_numbers<[1], [0], [0], [1], [0, 0, 1, 1], [], []>} : vector<128x1152xbf16>, vector<1152x128xbf16>, vector<128x128xf32> -> vector<128x128xf32>
    %c0_53 = arith.constant 0 : index
    %c0_54 = arith.constant 0 : index
    %50 = vector.load %arg8[%c0_53, %c0_54] : memref<1x128xf32, #tpu.memory_space<vmem>>, vector<1x128xf32>
    %51 = vector.broadcast %50 : vector<1x128xf32> to vector<128x128xf32>
    %52 = arith.addf %49, %51 : vector<128x128xf32>
    %cst_55 = arith.constant 0.000000e+00 : f32
    %53 = vector.broadcast %cst_55 : f32 to vector<128x128xf32>
    %54 = arith.maximumf %52, %53 : vector<128x128xf32>
    %c0_56 = arith.constant 0 : index
    %c0_57 = arith.constant 0 : index
    %c128 = arith.constant 128 : index
    %55 = vector.load %arg9[%c0_56, %c0_57, %c128] : memref<1x128x256xf32, #tpu.memory_space<vmem>>, vector<1x128x128xf32>
    %56 = vector.shape_cast %55 : vector<1x128x128xf32> to vector<128x128xf32>
    %57 = vector.shape_cast %54 : vector<128x128xf32> to vector<1x128x128xf32>
    tpu.vector_store %arg9[%c0_56, %c0_57, %c128], %57 {strides = array<i32>} : memref<1x128x256xf32, #tpu.memory_space<vmem>>, vector<1x128x128xf32>,
    return
  }
  func.func @transform_0(%arg0: i32, %arg1: i32) -> (i32, i32, i32, i32) {
    %c0_i32 = arith.constant 0 : i32
    %c0_i32_0 = arith.constant 0 : i32
    %c0_i32_1 = arith.constant 0 : i32
    %c0_i32_2 = arith.constant 0 : i32
    return %arg0, %c0_i32, %c0_i32_0, %c0_i32_1 : i32, i32, i32, i32
  }
  func.func @transform_1(%arg0: i32, %arg1: i32) -> (i32, i32) {
    %c0_i32 = arith.constant 0 : i32
    %c0_i32_0 = arith.constant 0 : i32
    %c0_i32_1 = arith.constant 0 : i32
    return %c0_i32, %c0_i32_0 : i32, i32
  }
  func.func @transform_2(%arg0: i32, %arg1: i32) -> (i32, i32) {
    %c0_i32 = arith.constant 0 : i32
    %c0_i32_0 = arith.constant 0 : i32
    %c0_i32_1 = arith.constant 0 : i32
    return %c0_i32, %c0_i32_0 : i32, i32
  }
  func.func @transform_3(%arg0: i32, %arg1: i32) -> (i32, i32) {
    %c0_i32 = arith.constant 0 : i32
    %c0_i32_0 = arith.constant 0 : i32
    %c0_i32_1 = arith.constant 0 : i32
    return %c0_i32, %c0_i32_0 : i32, i32
  }
  func.func @transform_4(%arg0: i32, %arg1: i32) -> (i32, i32) {
    %c0_i32 = arith.constant 0 : i32
    %c0_i32_0 = arith.constant 0 : i32
    %c0_i32_1 = arith.constant 0 : i32
    return %c0_i32, %c0_i32_0 : i32, i32
  }
  func.func @transform_5(%arg0: i32, %arg1: i32) -> (i32, i32) {
    %c0_i32 = arith.constant 0 : i32
    %c0_i32_0 = arith.constant 0 : i32
    %c0_i32_1 = arith.constant 0 : i32
    return %c0_i32, %c0_i32_0 : i32, i32
  }
  func.func @transform_6(%arg0: i32, %arg1: i32) -> (i32, i32) {
    %c0_i32 = arith.constant 0 : i32
    %c0_i32_0 = arith.constant 0 : i32
    %c0_i32_1 = arith.constant 0 : i32
    return %c0_i32, %c0_i32_0 : i32, i32
  }
  func.func @transform_7(%arg0: i32, %arg1: i32) -> (i32, i32, i32) {
    %c0_i32 = arith.constant 0 : i32
    %c0_i32_0 = arith.constant 0 : i32
    return %arg0, %arg1, %c0_i32 : i32, i32, i32
  }
}

</mosaic_0001>

<llo_original>
// kernel: tpu_custom_call.1
$region0: #{tpu_custom_call.1}
  #allocation0 [shape = 'u32[]', space=smem, size = 0x4, offset = 0x4, fixed_abs, tag = 'smem constant byte address 0x4 - core index']
  #allocation1 [shape = 'u32[144,128]{1,0:T(1,128)}', space=vmem, size = 0x12000, scoped, tag = 'internal scratch']
  #allocation2 [shape = 'bf16[10,18,128]{2,1,0:T(8,128)(2,1)}', space=vmem, size = 0xf000, scoped, tag = 'scratch operand']
  %s0 = inlined_call_operand.hbm [shape: bf16[2,18,16,128], index: 0, kind: input, shape index: {}]
  %s1 = inlined_call_operand.hbm [shape: bf16[128,128], index: 1, kind: input, shape index: {}]
  %s2 = inlined_call_operand.vmem [shape: f32[1,128], index: 2, kind: input, shape index: {}]
  %s3 = inlined_call_operand.hbm [shape: bf16[128,128], index: 3, kind: input, shape index: {}]
  %s4 = inlined_call_operand.vmem [shape: f32[1,128], index: 4, kind: input, shape index: {}]
  %s5 = inlined_call_operand.hbm [shape: bf16[1152,128], index: 5, kind: input, shape index: {}]
  %s6 = inlined_call_operand.vmem [shape: f32[1,128], index: 6, kind: input, shape index: {}]
  %s7 = inlined_call_operand.hbm [shape: f32[2,256,256], index: 7, kind: output, shape index: {}]
  %s8 = sld [smem:[#allocation0]]
  $region85: #{tpu_custom_call.1} parent=0
    _
  %s10 = ssub.s32 1, %s8
  %s11 = scalar_select 0, %s10, %s8
  $region1: #{tpu_custom_call.1} parent=0
    #allocation3 [shape = 'u8[147456]{0}', space=vmem, size = 0x24000, scoped, tag = 'input window, operand 0']
    #allocation4 [shape = 's32[2]{0}', space=sflag, size = 0x8, scoped, tag = 'scoped memory for tpu_custom_call.1']
    #allocation5 [shape = 's32[2]{0}', space=sflag, size = 0x8, scoped, tag = 'scoped memory for tpu_custom_call.1']
    #allocation6 [shape = 'u8[32768]{0}', space=vmem, size = 0x8000, scoped, tag = 'input window, operand 1, single buffered']
    #allocation7 [shape = 's32[1]{0}', space=sflag, size = 0x4, scoped, tag = 'scoped memory for tpu_custom_call.1']
    #allocation8 [shape = 'u8[32768]{0}', space=vmem, size = 0x8000, scoped, tag = 'input window, operand 3, single buffered']
    #allocation9 [shape = 'u8[294912]{0}', space=vmem, size = 0x48000, scoped, tag = 'input window, operand 5, single buffered']
    #allocation10 [shape = 's32[1]{0}', space=sflag, size = 0x4, scoped, tag = 'scoped memory for tpu_custom_call.1']
    #allocation11 [shape = 'u8[262144]{0}', space=vmem, size = 0x40000, scoped, tag = 'output window, operand 0']
    %12 = vsyncpa [#allocation4], 0
    %s13 = scalar_lea.sflag [#allocation4], 1
    %14 = vsyncpa %s13, 0
    %15 = vsyncpa [#allocation7], 0
    %16 = vsyncpa [#allocation10], 0
    %17 = vsyncpa [#allocation5], 0
    %s18 = scalar_lea.sflag [#allocation5], 1
    %19 = vsyncpa %s18, 0
    loop: start=0, step=1, limit=6
    $region2: #{tpu_custom_call.1} parent=1 // loop_pre_header
      _
    $region3: #{tpu_custom_call.1} parent=1 // loop_header
      %s21 = sphi 0, %s25
      %p22 = scmp.ge.s32.totalorder %s21, 6
      %s28 = sphi 0, %s40
      %s29 = sphi 0, %s36
      %s30 = sphi 0, %s28
      %s31 = sphi 0, %s29
      %s32 = sphi 0, %s30
      %s33 = sphi 0, %s31
      %s43 = sphi 0, %s45
      %s46 = sphi 0, %s43
      %s47 = sphi 0, %s46
      %s63 = sphi 0, %s47
      %s67 = sphi 0, %s67
      %s69 = sphi 0, %s67
      %s70 = sphi 0, %s69
      %s84 = sphi 0, %s70
      %s88 = sphi 0, %s88
      %s90 = sphi 0, %s88
      %s91 = sphi 0, %s90
      %s105 = sphi 0, %s91
      %s109 = sphi 0, %s109
      %s111 = sphi 0, %s109
      %s112 = sphi 0, %s111
      %s126 = sphi 0, %s112
      %s130 = sphi 0, %s130
      %s132 = sphi 0, %s130
      %s133 = sphi 0, %s132
      %s147 = sphi 0, %s133
      %s151 = sphi 0, %s151
      %s153 = sphi 0, %s151
      %s154 = sphi 0, %s153
      %s168 = sphi 0, %s154
      %s172 = sphi 0, %s172
      %s174 = sphi 0, %s172
      %s175 = sphi 0, %s174
      %s189 = sphi 0, %s175
      %s197 = sphi 0, %s199
      %s200 = sphi 0, %s197
      %s201 = sphi 0, %s200
      %s217 = sphi 0, %s201
    $region4: #{tpu_custom_call.1} parent=1 // loop_header_branch
      %24 = sbr.rel (%p22) target = $region8
    $region5: #{tpu_custom_call.1} parent=1 // loop_body
      %s26 = ssub.s32 %s21, 1
      %s27 = ssub.s32 %s21, 2
      %s34 = sadd.s32 1, %s29
      %p35 = scmp.ge.s32.totalorder %s34, 2
      %s36 = scalar_select %p35, 0, %s34
      %s37 = sadd.s32 1, %s28
      %s38 = scalar_select %p35, %s37, %s28
      %p39 = scmp.ge.s32.totalorder %s38, 2
      %s40 = scalar_select %p39, 0, %s38
      %s41 = ssub.s32 %s28, %s40
      %p42 = scmp.eq.s32.totalorder %s41, 0
      %s44 = sadd.s32 %s43, 1
      %s45 = scalar_select %p42, %s43, %s44
      %p48 = pneg %p42
      %p49 = scmp.eq.s32.totalorder %s21, 3
      %p50 = por %p48, %p49
      %p51 = scmp.ne.s32.totalorder %s43, %s46
      %p52 = scmp.eq.s32.totalorder %s21, 0
      %p53 = por %p51, %p52
      %p54 = scmp.ne.s32.totalorder %s43, %s46
      %p55 = scmp.eq.s32.totalorder %s26, 3
      %p56 = por %p54, %p55
      %p57 = scmp.ne.s32.totalorder %s46, %s47
      %p58 = scmp.eq.s32.totalorder %s26, 0
      %p59 = por %p57, %p58
      %p60 = scmp.ne.s32.totalorder %s46, %s47
      %p61 = scmp.eq.s32.totalorder %s27, 3
      %p62 = por %p60, %p61
      %p64 = scmp.ne.s32.totalorder %s47, %s63
      %p65 = scmp.eq.s32.totalorder %s27, 0
      %p66 = por %p64, %p65
      %s68 = sadd.s32 %s67, 1
      %p71 = scmp.eq.s32.totalorder %s21, 3
      %p72 = scmp.ne.s32.totalorder %s67, %s69
      %p73 = scmp.eq.s32.totalorder %s21, 0
      %p74 = por %p72, %p73
      %p75 = scmp.ne.s32.totalorder %s67, %s69
      %p76 = scmp.eq.s32.totalorder %s26, 3
      %p77 = por %p75, %p76
      %p78 = scmp.ne.s32.totalorder %s69, %s70
      %p79 = scmp.eq.s32.totalorder %s26, 0
      %p80 = por %p78, %p79
      %p81 = scmp.ne.s32.totalorder %s69, %s70
      %p82 = scmp.eq.s32.totalorder %s27, 3
      %p83 = por %p81, %p82
      %p85 = scmp.ne.s32.totalorder %s70, %s84
      %p86 = scmp.eq.s32.totalorder %s27, 0
      %p87 = por %p85, %p86
      %s89 = sadd.s32 %s88, 1
      %p92 = scmp.eq.s32.totalorder %s21, 3
      %p93 = scmp.ne.s32.totalorder %s88, %s90
      %p94 = scmp.eq.s32.totalorder %s21, 0
      %p95 = por %p93, %p94
      %p96 = scmp.ne.s32.totalorder %s88, %s90
      %p97 = scmp.eq.s32.totalorder %s26, 3
      %p98 = por %p96, %p97
      %p99 = scmp.ne.s32.totalorder %s90, %s91
      %p100 = scmp.eq.s32.totalorder %s26, 0
      %p101 = por %p99, %p100
      %p102 = scmp.ne.s32.totalorder %s90, %s91
      %p103 = scmp.eq.s32.totalorder %s27, 3
      %p104 = por %p102, %p103
      %p106 = scmp.ne.s32.totalorder %s91, %s105
      %p107 = scmp.eq.s32.totalorder %s27, 0
      %p108 = por %p106, %p107
      %s110 = sadd.s32 %s109, 1
      %p113 = scmp.eq.s32.totalorder %s21, 3
      %p114 = scmp.ne.s32.totalorder %s109, %s111
      %p115 = scmp.eq.s32.totalorder %s21, 0
      %p116 = por %p114, %p115
      %p117 = scmp.ne.s32.totalorder %s109, %s111
      %p118 = scmp.eq.s32.totalorder %s26, 3
      %p119 = por %p117, %p118
      %p120 = scmp.ne.s32.totalorder %s111, %s112
      %p121 = scmp.eq.s32.totalorder %s26, 0
      %p122 = por %p120, %p121
      %p123 = scmp.ne.s32.totalorder %s111, %s112
      %p124 = scmp.eq.s32.totalorder %s27, 3
      %p125 = por %p123, %p124
      %p127 = scmp.ne.s32.totalorder %s112, %s126
      %p128 = scmp.eq.s32.totalorder %s27, 0
      %p129 = por %p127, %p128
      %s131 = sadd.s32 %s130, 1
      %p134 = scmp.eq.s32.totalorder %s21, 3
      %p135 = scmp.ne.s32.totalorder %s130, %s132
      %p136 = scmp.eq.s32.totalorder %s21, 0
      %p137 = por %p135, %p136
      %p138 = scmp.ne.s32.totalorder %s130, %s132
      %p139 = scmp.eq.s32.totalorder %s26, 3
      %p140 = por %p138, %p139
      %p141 = scmp.ne.s32.totalorder %s132, %s133
      %p142 = scmp.eq.s32.totalorder %s26, 0
      %p143 = por %p141, %p142
      %p144 = scmp.ne.s32.totalorder %s132, %s133
      %p145 = scmp.eq.s32.totalorder %s27, 3
      %p146 = por %p144, %p145
      %p148 = scmp.ne.s32.totalorder %s133, %s147
      %p149 = scmp.eq.s32.totalorder %s27, 0
      %p150 = por %p148, %p149
      %s152 = sadd.s32 %s151, 1
      %p155 = scmp.eq.s32.totalorder %s21, 3
      %p156 = scmp.ne.s32.totalorder %s151, %s153
      %p157 = scmp.eq.s32.totalorder %s21, 0
      %p158 = por %p156, %p157
      %p159 = scmp.ne.s32.totalorder %s151, %s153
      %p160 = scmp.eq.s32.totalorder %s26, 3
      %p161 = por %p159, %p160
      %p162 = scmp.ne.s32.totalorder %s153, %s154
      %p163 = scmp.eq.s32.totalorder %s26, 0
      %p164 = por %p162, %p163
      %p165 = scmp.ne.s32.totalorder %s153, %s154
      %p166 = scmp.eq.s32.totalorder %s27, 3
      %p167 = por %p165, %p166
      %p169 = scmp.ne.s32.totalorder %s154, %s168
      %p170 = scmp.eq.s32.totalorder %s27, 0
      %p171 = por %p169, %p170
      %s173 = sadd.s32 %s172, 1
      %p176 = scmp.eq.s32.totalorder %s21, 3
      %p177 = scmp.ne.s32.totalorder %s172, %s174
      %p178 = scmp.eq.s32.totalorder %s21, 0
      %p179 = por %p177, %p178
      %p180 = scmp.ne.s32.totalorder %s172, %s174
      %p181 = scmp.eq.s32.totalorder %s26, 3
      %p182 = por %p180, %p181
      %p183 = scmp.ne.s32.totalorder %s174, %s175
      %p184 = scmp.eq.s32.totalorder %s26, 0
      %p185 = por %p183, %p184
      %p186 = scmp.ne.s32.totalorder %s174, %s175
      %p187 = scmp.eq.s32.totalorder %s27, 3
      %p188 = por %p186, %p187
      %p190 = scmp.ne.s32.totalorder %s175, %s189
      %p191 = scmp.eq.s32.totalorder %s27, 0
      %p192 = por %p190, %p191
      %s193 = ssub.s32 %s28, %s40
      %s194 = ssub.s32 %s29, %s36
      %s195 = sor.u32 %s193, %s194
      %p196 = scmp.eq.s32.totalorder %s195, 0
      %s198 = sadd.s32 %s197, 1
      %s199 = scalar_select %p196, %s197, %s198
      %p202 = pneg %p196
      %p203 = scmp.eq.s32.totalorder %s21, 3
      %p204 = por %p202, %p203
      %p205 = scmp.ne.s32.totalorder %s197, %s200
      %p206 = scmp.eq.s32.totalorder %s21, 0
      %p207 = por %p205, %p206
      %p208 = scmp.ne.s32.totalorder %s197, %s200
      %p209 = scmp.eq.s32.totalorder %s26, 3
      %p210 = por %p208, %p209
      %p211 = scmp.ne.s32.totalorder %s200, %s201
      %p212 = scmp.eq.s32.totalorder %s26, 0
      %p213 = por %p211, %p212
      %p214 = scmp.ne.s32.totalorder %s200, %s201
      %p215 = scmp.eq.s32.totalorder %s27, 3
      %p216 = por %p214, %p215
      %p218 = scmp.ne.s32.totalorder %s201, %s217
      %p219 = scmp.eq.s32.totalorder %s27, 0
      %p220 = por %p218, %p219
      %p221 = scmp.le.s32.totalorder 1, %s21
      %p222 = scmp.lt.s32.totalorder %s21, 5
      %p223 = pnand %p221, %p222
      %p224 = pneg %p223
      // Predicated region
      $region9: #{tpu_custom_call.1} parent=5 // pred_check
        _
      $region10: #{tpu_custom_call.1} parent=5 // pred_check_branch
        %226 = sbr.rel (%p223) target = $region12
      $region11: #{tpu_custom_call.1} parent=5 // pred_region
        %s227 = ssub.s32 %s21, 1
        // Predicated region
        $region13: #{tpu_custom_call.1} parent=11 // pred_check
          %p228 = pneg %p80
        $region14: #{tpu_custom_call.1} parent=11 // pred_check_branch
          %230 = sbr.rel (%p228) target = $region16
        $region15: #{tpu_custom_call.1} parent=11 // pred_region
          %s232 = ssub.s32 1024, 1024
          %233 = vsyncadd [#allocation7], %s232
          %s234 = sshll.u32 [#allocation6], 4
          %s235 = int_to_ptr.vmem [resolvable:$true] %s234
          %240 = dma.hbm_to_vmem [thread:$0]  %s1, 1024, %s235, [#allocation7], 64, 64, 4
        $region16: #{tpu_custom_call.1} parent=11 // pred_fallthru
          _
        // Predicated region
        $region17: #{tpu_custom_call.1} parent=11 // pred_check
          %p241 = pneg %p101
        $region18: #{tpu_custom_call.1} parent=11 // pred_check_branch
          %243 = sbr.rel (%p241) target = $region20
        $region19: #{tpu_custom_call.1} parent=11 // pred_region
          _
        $region20: #{tpu_custom_call.1} parent=11 // pred_fallthru
          _
        // Predicated region
        $region21: #{tpu_custom_call.1} parent=11 // pred_check
          %p244 = pneg %p122
        $region22: #{tpu_custom_call.1} parent=11 // pred_check_branch
          %246 = sbr.rel (%p244) target = $region24
        $region23: #{tpu_custom_call.1} parent=11 // pred_region
          %s248 = ssub.s32 1024, 1024
          %249 = vsyncadd [#allocation7], %s248
          %s250 = sshll.u32 [#allocation8], 4
          %s251 = int_to_ptr.vmem [resolvable:$true] %s250
          %256 = dma.hbm_to_vmem [thread:$0]  %s3, 1024, %s251, [#allocation7], 64, 64, 4
        $region24: #{tpu_custom_call.1} parent=11 // pred_fallthru
          _
        // Predicated region
        $region25: #{tpu_custom_call.1} parent=11 // pred_check
          %p257 = pneg %p143
        $region26: #{tpu_custom_call.1} parent=11 // pred_check_branch
          %259 = sbr.rel (%p257) target = $region28
        $region27: #{tpu_custom_call.1} parent=11 // pred_region
          _
        $region28: #{tpu_custom_call.1} parent=11 // pred_fallthru
          _
        // Predicated region
        $region29: #{tpu_custom_call.1} parent=11 // pred_check
          %p260 = pneg %p164
        $region30: #{tpu_custom_call.1} parent=11 // pred_check_branch
          %262 = sbr.rel (%p260) target = $region32
        $region31: #{tpu_custom_call.1} parent=11 // pred_region
          %s264 = ssub.s32 9216, 9216
          %265 = vsyncadd [#allocation10], %s264
          %s266 = sshll.u32 [#allocation9], 4
          %s267 = int_to_ptr.vmem [resolvable:$true] %s266
          %272 = dma.hbm_to_vmem [thread:$0]  %s5, 9216, %s267, [#allocation10], 64, 64, 4
        $region32: #{tpu_custom_call.1} parent=11 // pred_fallthru
          _
        // Predicated region
        $region33: #{tpu_custom_call.1} parent=11 // pred_check
          %p273 = pneg %p185
        $region34: #{tpu_custom_call.1} parent=11 // pred_check_branch
          %275 = sbr.rel (%p273) target = $region36
        $region35: #{tpu_custom_call.1} parent=11 // pred_region
          _
        $region36: #{tpu_custom_call.1} parent=11 // pred_fallthru
          _
      $region12: #{tpu_custom_call.1} parent=5 // pred_fallthru
        _
      %p276 = scmp.lt.s32.totalorder %s21, 4
      // Predicated region
      $region37: #{tpu_custom_call.1} parent=5 // pred_check
        %p277 = pneg %p276
      $region38: #{tpu_custom_call.1} parent=5 // pred_check_branch
        %279 = sbr.rel (%p277) target = $region40
      $region39: #{tpu_custom_call.1} parent=5 // pred_region
        // Predicated region
        $region41: #{tpu_custom_call.1} parent=39 // pred_check
          %p280 = pneg %p53
        $region42: #{tpu_custom_call.1} parent=39 // pred_check_branch
          %282 = sbr.rel (%p280) target = $region44
        $region43: #{tpu_custom_call.1} parent=39 // pred_region
          %s283 = sand.u32 %s43, 1
          %s284 = scalar_lea.sflag [#allocation4], %s283
          %s285 = sand.u32 %s43, 1
          %s286 = smul.addr %s285, 144
          %s287 = scalar_lea.vmem [#allocation3], %s286
          %s289 = ssub.s32 2304, 2304
          %290 = vsyncadd %s284, %s289
          %s291 = smul.addr %s28, 36
          %s292 = smul.addr %s291, 64
          %s293 = scalar_lea.hbm %s0, %s292
          %s294 = sshll.u32 %s287, 4
          %s295 = int_to_ptr.vmem [resolvable:$true] %s294
          %300 = dma.hbm_to_vmem [thread:$0]  %s293, 2304, %s295, %s284, 64, 64, 4
        $region44: #{tpu_custom_call.1} parent=39 // pred_fallthru
          _
      $region40: #{tpu_custom_call.1} parent=5 // pred_fallthru
        _
      %p301 = scmp.le.s32.totalorder 1, %s21
      %p302 = scmp.lt.s32.totalorder %s21, 5
      %p303 = pnand %p301, %p302
      %p304 = pneg %p303
      // Predicated region
      $region45: #{tpu_custom_call.1} parent=5 // pred_check
        _
      $region46: #{tpu_custom_call.1} parent=5 // pred_check_branch
        %306 = sbr.rel (%p303) target = $region48
      $region47: #{tpu_custom_call.1} parent=5 // pred_region
        %s307 = ssub.s32 %s21, 1
        %s308 = sand.u32 %s46, 1
        %s309 = scalar_lea.sflag [#allocation4], %s308
        %s310 = sand.u32 %s46, 1
        %s311 = smul.addr %s310, 144
        %s312 = scalar_lea.vmem [#allocation3], %s311
        // Predicated region
        $region49: #{tpu_custom_call.1} parent=47 // pred_check
          %p313 = pneg %p59
        $region50: #{tpu_custom_call.1} parent=47 // pred_check_branch
          %315 = sbr.rel (%p313) target = $region52
        $region51: #{tpu_custom_call.1} parent=47 // pred_region
          %316 = dma.done %s309, 2304
        $region52: #{tpu_custom_call.1} parent=47 // pred_fallthru
          _
        // Predicated region
        $region53: #{tpu_custom_call.1} parent=47 // pred_check
          %p317 = pneg %p80
        $region54: #{tpu_custom_call.1} parent=47 // pred_check_branch
          %319 = sbr.rel (%p317) target = $region56
        $region55: #{tpu_custom_call.1} parent=47 // pred_region
          %320 = dma.done [#allocation7], 1024
        $region56: #{tpu_custom_call.1} parent=47 // pred_fallthru
          _
        // Predicated region
        $region57: #{tpu_custom_call.1} parent=47 // pred_check
          %p321 = pneg %p122
        $region58: #{tpu_custom_call.1} parent=47 // pred_check_branch
          %323 = sbr.rel (%p321) target = $region60
        $region59: #{tpu_custom_call.1} parent=47 // pred_region
          %324 = dma.done [#allocation7], 1024
        $region60: #{tpu_custom_call.1} parent=47 // pred_fallthru
          _
        // Predicated region
        $region61: #{tpu_custom_call.1} parent=47 // pred_check
          %p325 = pneg %p164
        $region62: #{tpu_custom_call.1} parent=47 // pred_check_branch
          %327 = sbr.rel (%p325) target = $region64
        $region63: #{tpu_custom_call.1} parent=47 // pred_region
          %328 = dma.done [#allocation10], 9216
        $region64: #{tpu_custom_call.1} parent=47 // pred_fallthru
          _
        %s329 = sand.u32 %s46, 1
        %s330 = scalar_lea.sflag [#allocation4], %s329
        %s331 = sand.u32 %s46, 1
        %s332 = smul.addr %s331, 144
        %s333 = scalar_lea.vmem [#allocation3], %s332
        %p334 = pneg %p59
        %p335 = pneg %p56
        %p336 = pneg %p80
        %p337 = pneg %p77
        %p338 = pneg %p101
        %p339 = pneg %p98
        %p340 = pneg %p122
        %p341 = pneg %p119
        %p342 = pneg %p143
        %p343 = pneg %p140
        %p344 = pneg %p164
        %p345 = pneg %p161
        %p346 = pneg %p185
        %p347 = pneg %p182
        %p348 = pneg %p213
        %p349 = pneg %p210
        %s350 = sand.u32 %s200, 1
        %s351 = scalar_lea.sflag [#allocation5], %s350
        %s352 = sand.u32 %s200, 1
        %s353 = smul.addr %s352, 256
        %s354 = scalar_lea.vmem [#allocation11], %s353
        %s355 = smul.u32 16, %s31
        %s357 = smul.u32 %s31, 8
        %s358 = smul.u32 %s357, 2
        %s359 = smul.addr %s358, 4
        %s360 = scalar_lea.vmem %s312, %s359 [#allocation3]
        %v361 = vld [vmem:[%s360] sm:$0xf]
        %v362 = vld [vmem:[%s360 + $0x4] sm:$0xf]
        %v363 = vld [vmem:[%s360 + $0x8] sm:$0xf]
        %v364 = vld [vmem:[%s360 + $0xc] sm:$0xf]
        %v365 = vld [vmem:[%s360 + $0x10] sm:$0xf]
        %v366 = vld [vmem:[%s360 + $0x14] sm:$0xf]
        %v367 = vld [vmem:[%s360 + $0x18] sm:$0xf]
        %v368 = vld [vmem:[%s360 + $0x1c] sm:$0xf]
        %v369 = vld [vmem:[%s360 + $0x20] sm:$0xf]
        %v370 = vld [vmem:[%s360 + $0x24] sm:$0xf]
        %v371 = vld [vmem:[%s360 + $0x28] sm:$0xf]
        %v372 = vld [vmem:[%s360 + $0x2c] sm:$0xf]
        %v373 = vld [vmem:[%s360 + $0x30] sm:$0xf]
        %v374 = vld [vmem:[%s360 + $0x34] sm:$0xf]
        %v375 = vld [vmem:[%s360 + $0x38] sm:$0xf]
        %v376 = vld [vmem:[%s360 + $0x3c] sm:$0xf]
        %v377 = vld [vmem:[%s360 + $0x40] sm:$0xf]
        %v378 = vld [vmem:[%s360 + $0x44] sm:$0xf]
        %v379 = vld [vmem:[%s360 + $0x48] sm:$0xf]
        %v380 = vld [vmem:[%s360 + $0x4c] sm:$0xf]
        %v381 = vld [vmem:[#allocation6] sm:$0xf]
        %v382 = vld [vmem:[#allocation6 + $0x4] sm:$0xf]
        %v383 = vld [vmem:[#allocation6 + $0x8] sm:$0xf]
        %v384 = vld [vmem:[#allocation6 + $0xc] sm:$0xf]
        %v385 = vld [vmem:[#allocation6 + $0x10] sm:$0xf]
        %v386 = vld [vmem:[#allocation6 + $0x14] sm:$0xf]
        %v387 = vld [vmem:[#allocation6 + $0x18] sm:$0xf]
        %v388 = vld [vmem:[#allocation6 + $0x1c] sm:$0xf]
        %v389 = vld [vmem:[#allocation6 + $0x20] sm:$0xf]
        %v390 = vld [vmem:[#allocation6 + $0x24] sm:$0xf]
        %v391 = vld [vmem:[#allocation6 + $0x28] sm:$0xf]
        %v392 = vld [vmem:[#allocation6 + $0x2c] sm:$0xf]
        %v393 = vld [vmem:[#allocation6 + $0x30] sm:$0xf]
        %v394 = vld [vmem:[#allocation6 + $0x34] sm:$0xf]
        %v395 = vld [vmem:[#allocation6 + $0x38] sm:$0xf]
        %v396 = vld [vmem:[#allocation6 + $0x3c] sm:$0xf]
        %v397 = vld [vmem:[%s2] sm:$0x1]
        %v399 = vlaneseq
        %v400 = vshrl.u32 %v399, 7
        %v401 = vsub.s32 0, %v400
        %v402 = vrot.slane %v397, %v401
        %v424 = vunpack.c.l.b16 %v361
        %v425 = vunpack.c.l.b16 %v362
        %v426 = vunpack.c.l.b16 %v363
        %v427 = vunpack.c.l.b16 %v364
        %v428 = vunpack.c.l.b16 %v365
        %v429 = vunpack.c.l.b16 %v366
        %v430 = vunpack.c.l.b16 %v367
        %v431 = vunpack.c.l.b16 %v368
        %v432 = vunpack.c.l.b16 %v369
        %v433 = vunpack.c.l.b16 %v370
        %v434 = vunpack.c.l.b16 %v371
        %v435 = vunpack.c.l.b16 %v372
        %v436 = vunpack.c.l.b16 %v373
        %v437 = vunpack.c.l.b16 %v374
        %v438 = vunpack.c.l.b16 %v375
        %v439 = vunpack.c.l.b16 %v376
        %v440 = vunpack.c.l.b16 %v377
        %v441 = vunpack.c.l.b16 %v378
        %v442 = vunpack.c.l.b16 %v379
        %v443 = vunpack.c.l.b16 %v380
        %v444 = vpack.c.b16 %v425, %v424
        %v445 = vpack.c.b16 %v427, %v426
        %v446 = vpack.c.b16 %v429, %v428
        %v447 = vpack.c.b16 %v431, %v430
        %v448 = vpack.c.b16 %v433, %v432
        %v449 = vpack.c.b16 %v435, %v434
        %v450 = vpack.c.b16 %v437, %v436
        %v451 = vpack.c.b16 %v439, %v438
        %v452 = vpack.c.b16 %v441, %v440
        %v453 = vpack.c.b16 %v443, %v442
        %v480 = vunpack.c.l.b16 %v381
        %v481 = vunpack.c.l.b16 %v382
        %v482 = vunpack.c.l.b16 %v383
        %v483 = vunpack.c.l.b16 %v384
        %v484 = vunpack.c.l.b16 %v385
        %v485 = vunpack.c.l.b16 %v386
        %v486 = vunpack.c.l.b16 %v387
        %v487 = vunpack.c.l.b16 %v388
        %v488 = vunpack.c.l.b16 %v389
        %v489 = vunpack.c.l.b16 %v390
        %v490 = vunpack.c.l.b16 %v391
        %v491 = vunpack.c.l.b16 %v392
        %v492 = vunpack.c.l.b16 %v393
        %v493 = vunpack.c.l.b16 %v394
        %v494 = vunpack.c.l.b16 %v395
        %v495 = vunpack.c.l.b16 %v396
        %v496 = vpack.c.b16 %v481, %v480
        %v497 = vpack.c.b16 %v483, %v482
        %v498 = vpack.c.b16 %v485, %v484
        %v499 = vpack.c.b16 %v487, %v486
        %v500 = vpack.c.b16 %v489, %v488
        %v501 = vpack.c.b16 %v491, %v490
        %v502 = vpack.c.b16 %v493, %v492
        %v503 = vpack.c.b16 %v495, %v494
        %512 = vmatprep.subr.bf16.mxu0 0
        %513 = vmatpush1.bf16.msra.mxu0 %v496
        %514 = vmatprep.subr.bf16.mxu0 0
        %515 = vmatpush1.bf16.msra.mxu0 %v497
        %516 = vmatprep.subr.bf16.mxu0 0
        %517 = vmatpush1.bf16.msra.mxu0 %v498
        %518 = vmatprep.subr.bf16.mxu0 0
        %519 = vmatpush1.bf16.msra.mxu0 %v499
        %520 = vmatprep.subr.bf16.mxu0 0
        %521 = vmatpush1.bf16.msra.mxu0 %v500
        %522 = vmatprep.subr.bf16.mxu0 0
        %523 = vmatpush1.bf16.msra.mxu0 %v501
        %524 = vmatprep.subr.bf16.mxu0 0
        %525 = vmatpush1.bf16.msra.mxu0 %v502
        %526 = vmatprep.subr.bf16.mxu0 0
        %527 = vmatpush1.bf16.msra.mxu0 %v503
        %528 = vmatprep.subr.bf16.mxu0 0
        %529 = vmatpush1.bf16.msra.mxu0 0
        %530 = vmatprep.subr.bf16.mxu0 0
        %531 = vmatpush1.bf16.msra.mxu0 0
        %532 = vmatprep.subr.bf16.mxu0 0
        %533 = vmatpush1.bf16.msra.mxu0 0
        %534 = vmatprep.subr.bf16.mxu0 0
        %535 = vmatpush1.bf16.msra.mxu0 0
        %536 = vmatprep.subr.bf16.mxu0 0
        %537 = vmatpush1.bf16.msra.mxu0 0
        %538 = vmatprep.subr.bf16.mxu0 0
        %539 = vmatpush1.bf16.msra.mxu0 0
        %540 = vmatprep.subr.bf16.mxu0 0
        %541 = vmatpush1.bf16.msra.mxu0 0
        %542 = vmatprep.subr.bf16.mxu0 0
        %543 = vmatpush1.bf16.msra.mxu0 0
        %544 = vmatprep.mubr.bf16.mxu0 0
        %545 = vmatmul.mubr.bf16.gmra.mrb[0].mxu0 %v444
        %v546 = vpop.f32.mrb[0].mxu0
        %v547 = vadd.f32 %v402, %v546
        %v548 = vpop.f32.mrb[0].mxu0
        %v549 = vpop.f32.mrb[0].mxu0
        %v550 = vadd.f32 %v402, %v549
        %v551 = vpop.f32.mrb[0].mxu0
        %552 = vmatprep.mubr.bf16.mxu0 0
        %553 = vmatmul.mubr.bf16.gmra.mrb[0].mxu0 %v445
        %v554 = vpop.f32.mrb[0].mxu0
        %v555 = vadd.f32 %v402, %v554
        %v556 = vpop.f32.mrb[0].mxu0
        %v557 = vpop.f32.mrb[0].mxu0
        %v558 = vadd.f32 %v402, %v557
        %v559 = vpop.f32.mrb[0].mxu0
        %560 = vmatprep.mubr.bf16.mxu0 0
        %561 = vmatmul.mubr.bf16.gmra.mrb[0].mxu0 %v446
        %v562 = vpop.f32.mrb[0].mxu0
        %v563 = vadd.f32 %v402, %v562
        %v564 = vpop.f32.mrb[0].mxu0
        %v565 = vpop.f32.mrb[0].mxu0
        %v566 = vadd.f32 %v402, %v565
        %v567 = vpop.f32.mrb[0].mxu0
        %568 = vmatprep.mubr.bf16.mxu0 0
        %569 = vmatmul.mubr.bf16.gmra.mrb[0].mxu0 %v447
        %v570 = vpop.f32.mrb[0].mxu0
        %v571 = vadd.f32 %v402, %v570
        %v572 = vpop.f32.mrb[0].mxu0
        %v573 = vpop.f32.mrb[0].mxu0
        %v574 = vadd.f32 %v402, %v573
        %v575 = vpop.f32.mrb[0].mxu0
        %576 = vmatprep.mubr.bf16.mxu0 0
        %577 = vmatmul.mubr.bf16.gmra.mrb[0].mxu0 %v448
        %v578 = vpop.f32.mrb[0].mxu0
        %v579 = vadd.f32 %v402, %v578
        %v580 = vpop.f32.mrb[0].mxu0
        %v581 = vpop.f32.mrb[0].mxu0
        %v582 = vadd.f32 %v402, %v581
        %v583 = vpop.f32.mrb[0].mxu0
        %584 = vmatprep.mubr.bf16.mxu0 0
        %585 = vmatmul.mubr.bf16.gmra.mrb[0].mxu0 %v449
        %v586 = vpop.f32.mrb[0].mxu0
        %v587 = vadd.f32 %v402, %v586
        %v588 = vpop.f32.mrb[0].mxu0
        %v589 = vpop.f32.mrb[0].mxu0
        %v590 = vadd.f32 %v402, %v589
        %v591 = vpop.f32.mrb[0].mxu0
        %592 = vmatprep.mubr.bf16.mxu0 0
        %593 = vmatmul.mubr.bf16.gmra.mrb[0].mxu0 %v450
        %v594 = vpop.f32.mrb[0].mxu0
        %v595 = vadd.f32 %v402, %v594
        %v596 = vpop.f32.mrb[0].mxu0
        %v597 = vpop.f32.mrb[0].mxu0
        %v598 = vadd.f32 %v402, %v597
        %v599 = vpop.f32.mrb[0].mxu0
        %600 = vmatprep.mubr.bf16.mxu0 0
        %601 = vmatmul.mubr.bf16.gmra.mrb[0].mxu0 %v451
        %v602 = vpop.f32.mrb[0].mxu0
        %v603 = vadd.f32 %v402, %v602
        %v604 = vpop.f32.mrb[0].mxu0
        %v605 = vpop.f32.mrb[0].mxu0
        %v606 = vadd.f32 %v402, %v605
        %v607 = vpop.f32.mrb[0].mxu0
        %608 = vmatprep.mubr.bf16.mxu0 0
        %609 = vmatmul.mubr.bf16.gmra.mrb[0].mxu0 %v452
        %v610 = vpop.f32.mrb[0].mxu0
        %v611 = vadd.f32 %v402, %v610
        %v612 = vpop.f32.mrb[0].mxu0
        %v613 = vpop.f32.mrb[0].mxu0
        %v614 = vadd.f32 %v402, %v613
        %v615 = vpop.f32.mrb[0].mxu0
        %616 = vmatprep.mubr.bf16.mxu0 0
        %617 = vmatmul.mubr.bf16.gmra.mrb[0].mxu0 %v453
        %v618 = vpop.f32.mrb[0].mxu0
        %v619 = vadd.f32 %v402, %v618
        %v620 = vpop.f32.mrb[0].mxu0
        %v621 = vpop.f32.mrb[0].mxu0
        %v622 = vadd.f32 %v402, %v621
        %v623 = vpop.f32.mrb[0].mxu0
        %624 = vdwg.mxu0
        %v625 = vmax.f32 %v547, 0.0
        %v626 = vmax.f32 %v550, 0.0
        %v627 = vmax.f32 %v555, 0.0
        %v628 = vmax.f32 %v558, 0.0
        %v629 = vmax.f32 %v563, 0.0
        %v630 = vmax.f32 %v566, 0.0
        %v631 = vmax.f32 %v571, 0.0
        %v632 = vmax.f32 %v574, 0.0
        %v633 = vmax.f32 %v579, 0.0
        %v634 = vmax.f32 %v582, 0.0
        %v635 = vmax.f32 %v587, 0.0
        %v636 = vmax.f32 %v590, 0.0
        %v637 = vmax.f32 %v595, 0.0
        %v638 = vmax.f32 %v598, 0.0
        %v639 = vmax.f32 %v603, 0.0
        %v640 = vmax.f32 %v606, 0.0
        %v641 = vmax.f32 %v611, 0.0
        %v642 = vmax.f32 %v614, 0.0
        %v643 = vmax.f32 %v619, 0.0
        %v644 = vmax.f32 %v622, 0.0
        %v645 = vpack.c.bf16 %v628, %v627
        %v646 = vpack.c.bf16 %v630, %v629
        %v647 = vpack.c.bf16 %v632, %v631
        %v648 = vpack.c.bf16 %v634, %v633
        %v649 = vpack.c.bf16 %v636, %v635
        %v650 = vpack.c.bf16 %v638, %v637
        %v651 = vpack.c.bf16 %v640, %v639
        %v652 = vpack.c.bf16 %v642, %v641
        %v653 = vld [vmem:[#allocation8] sm:$0xf]
        %v654 = vld [vmem:[#allocation8 + $0x4] sm:$0xf]
        %v655 = vld [vmem:[#allocation8 + $0x8] sm:$0xf]
        %v656 = vld [vmem:[#allocation8 + $0xc] sm:$0xf]
        %v657 = vld [vmem:[#allocation8 + $0x10] sm:$0xf]
        %v658 = vld [vmem:[#allocation8 + $0x14] sm:$0xf]
        %v659 = vld [vmem:[#allocation8 + $0x18] sm:$0xf]
        %v660 = vld [vmem:[#allocation8 + $0x1c] sm:$0xf]
        %v661 = vld [vmem:[#allocation8 + $0x20] sm:$0xf]
        %v662 = vld [vmem:[#allocation8 + $0x24] sm:$0xf]
        %v663 = vld [vmem:[#allocation8 + $0x28] sm:$0xf]
        %v664 = vld [vmem:[#allocation8 + $0x2c] sm:$0xf]
        %v665 = vld [vmem:[#allocation8 + $0x30] sm:$0xf]
        %v666 = vld [vmem:[#allocation8 + $0x34] sm:$0xf]
        %v667 = vld [vmem:[#allocation8 + $0x38] sm:$0xf]
        %v668 = vld [vmem:[#allocation8 + $0x3c] sm:$0xf]
        %v669 = vld [vmem:[%s4] sm:$0x1]
        %v671 = vlaneseq
        %v672 = vshrl.u32 %v671, 7
        %v673 = vsub.s32 0, %v672
        %v674 = vrot.slane %v669, %v673
        %v692 = vunpack.c.l.b16 %v653
        %v693 = vunpack.c.l.b16 %v654
        %v694 = vunpack.c.l.b16 %v655
        %v695 = vunpack.c.l.b16 %v656
        %v696 = vunpack.c.l.b16 %v657
        %v697 = vunpack.c.l.b16 %v658
        %v698 = vunpack.c.l.b16 %v659
        %v699 = vunpack.c.l.b16 %v660
        %v700 = vunpack.c.l.b16 %v661
        %v701 = vunpack.c.l.b16 %v662
        %v702 = vunpack.c.l.b16 %v663
        %v703 = vunpack.c.l.b16 %v664
        %v704 = vunpack.c.l.b16 %v665
        %v705 = vunpack.c.l.b16 %v666
        %v706 = vunpack.c.l.b16 %v667
        %v707 = vunpack.c.l.b16 %v668
        %v708 = vpack.c.b16 %v693, %v692
        %v709 = vpack.c.b16 %v695, %v694
        %v710 = vpack.c.b16 %v697, %v696
        %v711 = vpack.c.b16 %v699, %v698
        %v712 = vpack.c.b16 %v701, %v700
        %v713 = vpack.c.b16 %v703, %v702
        %v714 = vpack.c.b16 %v705, %v704
        %v715 = vpack.c.b16 %v707, %v706
        %724 = vmatprep.subr.bf16.mxu0 0
        %725 = vmatpush1.bf16.msra.mxu0 %v708
        %726 = vmatprep.subr.bf16.mxu0 0
        %727 = vmatpush1.bf16.msra.mxu0 %v709
        %728 = vmatprep.subr.bf16.mxu0 0
        %729 = vmatpush1.bf16.msra.mxu0 %v710
        %730 = vmatprep.subr.bf16.mxu0 0
        %731 = vmatpush1.bf16.msra.mxu0 %v711
        %732 = vmatprep.subr.bf16.mxu0 0
        %733 = vmatpush1.bf16.msra.mxu0 %v712
        %734 = vmatprep.subr.bf16.mxu0 0
        %735 = vmatpush1.bf16.msra.mxu0 %v713
        %736 = vmatprep.subr.bf16.mxu0 0
        %737 = vmatpush1.bf16.msra.mxu0 %v714
        %738 = vmatprep.subr.bf16.mxu0 0
        %739 = vmatpush1.bf16.msra.mxu0 %v715
        %740 = vmatprep.subr.bf16.mxu0 0
        %741 = vmatpush1.bf16.msra.mxu0 0
        %742 = vmatprep.subr.bf16.mxu0 0
        %743 = vmatpush1.bf16.msra.mxu0 0
        %744 = vmatprep.subr.bf16.mxu0 0
        %745 = vmatpush1.bf16.msra.mxu0 0
        %746 = vmatprep.subr.bf16.mxu0 0
        %747 = vmatpush1.bf16.msra.mxu0 0
        %748 = vmatprep.subr.bf16.mxu0 0
        %749 = vmatpush1.bf16.msra.mxu0 0
        %750 = vmatprep.subr.bf16.mxu0 0
        %751 = vmatpush1.bf16.msra.mxu0 0
        %752 = vmatprep.subr.bf16.mxu0 0
        %753 = vmatpush1.bf16.msra.mxu0 0
        %754 = vmatprep.subr.bf16.mxu0 0
        %755 = vmatpush1.bf16.msra.mxu0 0
        %756 = vmatprep.mubr.bf16.mxu0 0
        %757 = vmatmul.mubr.bf16.gmra.mrb[0].mxu0 %v645
        %v758 = vpop.f32.mrb[0].mxu0
        %v759 = vadd.f32 %v674, %v758
        %v760 = vpop.f32.mrb[0].mxu0
        %v761 = vpop.f32.mrb[0].mxu0
        %v762 = vadd.f32 %v674, %v761
        %v763 = vpop.f32.mrb[0].mxu0
        %764 = vmatprep.mubr.bf16.mxu0 0
        %765 = vmatmul.mubr.bf16.gmra.mrb[0].mxu0 %v646
        %v766 = vpop.f32.mrb[0].mxu0
        %v767 = vadd.f32 %v674, %v766
        %v768 = vpop.f32.mrb[0].mxu0
        %v769 = vpop.f32.mrb[0].mxu0
        %v770 = vadd.f32 %v674, %v769
        %v771 = vpop.f32.mrb[0].mxu0
        %772 = vmatprep.mubr.bf16.mxu0 0
        %773 = vmatmul.mubr.bf16.gmra.mrb[0].mxu0 %v647
        %v774 = vpop.f32.mrb[0].mxu0
        %v775 = vadd.f32 %v674, %v774
        %v776 = vpop.f32.mrb[0].mxu0
        %v777 = vpop.f32.mrb[0].mxu0
        %v778 = vadd.f32 %v674, %v777
        %v779 = vpop.f32.mrb[0].mxu0
        %780 = vmatprep.mubr.bf16.mxu0 0
        %781 = vmatmul.mubr.bf16.gmra.mrb[0].mxu0 %v648
        %v782 = vpop.f32.mrb[0].mxu0
        %v783 = vadd.f32 %v674, %v782
        %v784 = vpop.f32.mrb[0].mxu0
        %v785 = vpop.f32.mrb[0].mxu0
        %v786 = vadd.f32 %v674, %v785
        %v787 = vpop.f32.mrb[0].mxu0
        %788 = vmatprep.mubr.bf16.mxu0 0
        %789 = vmatmul.mubr.bf16.gmra.mrb[0].mxu0 %v649
        %v790 = vpop.f32.mrb[0].mxu0
        %v791 = vadd.f32 %v674, %v790
        %v792 = vpop.f32.mrb[0].mxu0
        %v793 = vpop.f32.mrb[0].mxu0
        %v794 = vadd.f32 %v674, %v793
        %v795 = vpop.f32.mrb[0].mxu0
        %796 = vmatprep.mubr.bf16.mxu0 0
        %797 = vmatmul.mubr.bf16.gmra.mrb[0].mxu0 %v650
        %v798 = vpop.f32.mrb[0].mxu0
        %v799 = vadd.f32 %v674, %v798
        %v800 = vpop.f32.mrb[0].mxu0
        %v801 = vpop.f32.mrb[0].mxu0
        %v802 = vadd.f32 %v674, %v801
        %v803 = vpop.f32.mrb[0].mxu0
        %804 = vmatprep.mubr.bf16.mxu0 0
        %805 = vmatmul.mubr.bf16.gmra.mrb[0].mxu0 %v651
        %v806 = vpop.f32.mrb[0].mxu0
        %v807 = vadd.f32 %v674, %v806
        %v808 = vpop.f32.mrb[0].mxu0
        %v809 = vpop.f32.mrb[0].mxu0
        %v810 = vadd.f32 %v674, %v809
        %v811 = vpop.f32.mrb[0].mxu0
        %812 = vmatprep.mubr.bf16.mxu0 0
        %813 = vmatmul.mubr.bf16.gmra.mrb[0].mxu0 %v652
        %v814 = vpop.f32.mrb[0].mxu0
        %v815 = vadd.f32 %v674, %v814
        %v816 = vpop.f32.mrb[0].mxu0
        %v817 = vpop.f32.mrb[0].mxu0
        %v818 = vadd.f32 %v674, %v817
        %v819 = vpop.f32.mrb[0].mxu0
        %820 = vdwg.mxu0
        %v821 = vmax.f32 %v759, 0.0
        %v822 = vmax.f32 %v762, 0.0
        %v823 = vmax.f32 %v767, 0.0
        %v824 = vmax.f32 %v770, 0.0
        %v825 = vmax.f32 %v775, 0.0
        %v826 = vmax.f32 %v778, 0.0
        %v827 = vmax.f32 %v783, 0.0
        %v828 = vmax.f32 %v786, 0.0
        %v829 = vmax.f32 %v791, 0.0
        %v830 = vmax.f32 %v794, 0.0
        %v831 = vmax.f32 %v799, 0.0
        %v832 = vmax.f32 %v802, 0.0
        %v833 = vmax.f32 %v807, 0.0
        %v834 = vmax.f32 %v810, 0.0
        %v835 = vmax.f32 %v815, 0.0
        %v836 = vmax.f32 %v818, 0.0
        %837 = vst [vmem:[%s354] sm:$0xff] %v821
        %838 = vst [vmem:[%s354 + $0x10] sm:$0xff] %v822
        %839 = vst [vmem:[%s354 + $0x20] sm:$0xff] %v823
        %840 = vst [vmem:[%s354 + $0x30] sm:$0xff] %v824
        %841 = vst [vmem:[%s354 + $0x40] sm:$0xff] %v825
        %842 = vst [vmem:[%s354 + $0x50] sm:$0xff] %v826
        %843 = vst [vmem:[%s354 + $0x60] sm:$0xff] %v827
        %844 = vst [vmem:[%s354 + $0x70] sm:$0xff] %v828
        %845 = vst [vmem:[%s354 + $0x80] sm:$0xff] %v829
        %846 = vst [vmem:[%s354 + $0x90] sm:$0xff] %v830
        %847 = vst [vmem:[%s354 + $0xa0] sm:$0xff] %v831
        %848 = vst [vmem:[%s354 + $0xb0] sm:$0xff] %v832
        %849 = vst [vmem:[%s354 + $0xc0] sm:$0xff] %v833
        %850 = vst [vmem:[%s354 + $0xd0] sm:$0xff] %v834
        %851 = vst [vmem:[%s354 + $0xe0] sm:$0xff] %v835
        %852 = vst [vmem:[%s354 + $0xf0] sm:$0xff] %v836
        %853 = vst [vmem:[#allocation2] sm:$0xf] 0
        %854 = vst [vmem:[#allocation2 + $0x4] sm:$0xf] 0
        %855 = vst [vmem:[#allocation2 + $0x8] sm:$0x1] 0
        %856 = vst [vmem:[#allocation2 + $0xc] sm:$0xf] 0
        %857 = vst [vmem:[#allocation2 + $0x10] sm:$0xf] 0
        %858 = vst [vmem:[#allocation2 + $0x14] sm:$0x1] 0
        %859 = vst [vmem:[#allocation2 + $0x18] sm:$0xf] 0
        %860 = vst [vmem:[#allocation2 + $0x1c] sm:$0xf] 0
        %861 = vst [vmem:[#allocation2 + $0x20] sm:$0x1] 0
        %862 = vst [vmem:[#allocation2 + $0x24] sm:$0xf] 0
        %863 = vst [vmem:[#allocation2 + $0x28] sm:$0xf] 0
        %864 = vst [vmem:[#allocation2 + $0x2c] sm:$0x1] 0
        %865 = vst [vmem:[#allocation2 + $0x30] sm:$0xf] 0
        %866 = vst [vmem:[#allocation2 + $0x34] sm:$0xf] 0
        %867 = vst [vmem:[#allocation2 + $0x38] sm:$0x1] 0
        %868 = vst [vmem:[#allocation2 + $0x3c] sm:$0xf] 0
        %869 = vst [vmem:[#allocation2 + $0x40] sm:$0xf] 0
        %870 = vst [vmem:[#allocation2 + $0x44] sm:$0x1] 0
        %871 = vst [vmem:[#allocation2 + $0x48] sm:$0xf] 0
        %872 = vst [vmem:[#allocation2 + $0x4c] sm:$0xf] 0
        %873 = vst [vmem:[#allocation2 + $0x50] sm:$0x1] 0
        %874 = vst [vmem:[#allocation2 + $0x54] sm:$0xf] 0
        %875 = vst [vmem:[#allocation2 + $0x58] sm:$0xf] 0
        %876 = vst [vmem:[#allocation2 + $0x5c] sm:$0x1] 0
        %877 = vst [vmem:[#allocation2 + $0x60] sm:$0xf] 0
        %878 = vst [vmem:[#allocation2 + $0x64] sm:$0xf] 0
        %879 = vst [vmem:[#allocation2 + $0x68] sm:$0x1] 0
        %880 = vst [vmem:[#allocation2 + $0x6c] sm:$0xf] 0
        %881 = vst [vmem:[#allocation2 + $0x70] sm:$0xf] 0
        %882 = vst [vmem:[#allocation2 + $0x74] sm:$0x1] 0
        %v883 = vpack.c.bf16 %v626, %v625
        %v884 = vpack.c.bf16 %v644, %v643
        %v895 = vunpack.c.l.b16 %v883
        %v896 = vunpack.c.h.b16 %v883
        %v897 = vunpack.c.l.b16 %v645
        %v898 = vunpack.c.h.b16 %v645
        %v899 = vunpack.c.l.b16 %v646
        %v900 = vunpack.c.h.b16 %v646
        %v901 = vunpack.c.l.b16 %v647
        %v902 = vunpack.c.h.b16 %v647
        %v903 = vunpack.c.l.b16 %v648
        %v904 = vunpack.c.h.b16 %v648
        %v905 = vunpack.c.l.b16 %v649
        %v906 = vunpack.c.h.b16 %v649
        %v907 = vunpack.c.l.b16 %v650
        %v908 = vunpack.c.h.b16 %v650
        %v909 = vunpack.c.l.b16 %v651
        %v910 = vunpack.c.h.b16 %v651
        %v911 = vunpack.c.l.b16 %v652
        %v912 = vunpack.c.h.b16 %v652
        %v913 = vunpack.c.l.b16 %v884
        %v914 = vunpack.c.h.b16 %v884
        %v915 = vpack.c.b16 %v895, %v895
        %v916 = vpack.c.b16 %v896, %v896
        %v917 = vpack.c.b16 %v897, %v897
        %v918 = vpack.c.b16 %v898, %v898
        %v919 = vpack.c.b16 %v899, %v899
        %v920 = vpack.c.b16 %v900, %v900
        %v921 = vpack.c.b16 %v901, %v901
        %v922 = vpack.c.b16 %v902, %v902
        %v923 = vpack.c.b16 %v903, %v903
        %v924 = vpack.c.b16 %v904, %v904
        %v925 = vpack.c.b16 %v905, %v905
        %v926 = vpack.c.b16 %v906, %v906
        %v927 = vpack.c.b16 %v907, %v907
        %v928 = vpack.c.b16 %v908, %v908
        %v929 = vpack.c.b16 %v909, %v909
        %v930 = vpack.c.b16 %v910, %v910
        %v931 = vpack.c.b16 %v911, %v911
        %v932 = vpack.c.b16 %v912, %v912
        %v933 = vpack.c.b16 %v913, %v913
        %v934 = vpack.c.b16 %v914, %v914
        %vm935 = vsmask.f32 256
        %vm936 = vsmask.f32 4368
        %vm937 = vmor %vm935, %vm936
        %v939 = vshrl.u32 %v915, 16
        %v941 = vrot.slane %v939, 7
        %v942 = vshll.u32 %v915, 16
        %v944 = vor.u32 %v941, %v942
        %v945 = vrot.slane %v941, 4
        %v947 = vshrl.u32 %v916, 16
        %v949 = vrot.slane %v947, 7
        %v950 = vshll.u32 %v916, 16
        %v952 = vor.u32 %v949, %v950
        %v953 = vsel %vm937, %v945, %v952
        %v954 = vrot.slane %v949, 4
        %v956 = vshrl.u32 %v917, 16
        %v958 = vrot.slane %v956, 7
        %v959 = vshll.u32 %v917, 16
        %v961 = vor.u32 %v958, %v959
        %v962 = vrot.slane %v958, 4
        %v964 = vshrl.u32 %v918, 16
        %v966 = vrot.slane %v964, 7
        %v967 = vshll.u32 %v918, 16
        %v969 = vor.u32 %v966, %v967
        %v970 = vsel %vm937, %v962, %v969
        %v971 = vrot.slane %v966, 4
        %v973 = vshrl.u32 %v919, 16
        %v975 = vrot.slane %v973, 7
        %v976 = vshll.u32 %v919, 16
        %v978 = vor.u32 %v975, %v976
        %v979 = vrot.slane %v975, 4
        %v981 = vshrl.u32 %v920, 16
        %v983 = vrot.slane %v981, 7
        %v984 = vshll.u32 %v920, 16
        %v986 = vor.u32 %v983, %v984
        %v987 = vsel %vm937, %v979, %v986
        %v988 = vrot.slane %v983, 4
        %v990 = vshrl.u32 %v921, 16
        %v992 = vrot.slane %v990, 7
        %v993 = vshll.u32 %v921, 16
        %v995 = vor.u32 %v992, %v993
        %v996 = vrot.slane %v992, 4
        %v998 = vshrl.u32 %v922, 16
        %v1000 = vrot.slane %v998, 7
        %v1001 = vshll.u32 %v922, 16
        %v1003 = vor.u32 %v1000, %v1001
        %v1004 = vsel %vm937, %v996, %v1003
        %v1005 = vrot.slane %v1000, 4
        %v1007 = vshrl.u32 %v923, 16
        %v1009 = vrot.slane %v1007, 7
        %v1010 = vshll.u32 %v923, 16
        %v1012 = vor.u32 %v1009, %v1010
        %v1013 = vrot.slane %v1009, 4
        %v1015 = vshrl.u32 %v924, 16
        %v1017 = vrot.slane %v1015, 7
        %v1018 = vshll.u32 %v924, 16
        %v1020 = vor.u32 %v1017, %v1018
        %v1021 = vsel %vm937, %v1013, %v1020
        %v1022 = vrot.slane %v1017, 4
        %v1024 = vshrl.u32 %v925, 16
        %v1026 = vrot.slane %v1024, 7
        %v1027 = vshll.u32 %v925, 16
        %v1029 = vor.u32 %v1026, %v1027
        %v1030 = vrot.slane %v1026, 4
        %v1032 = vshrl.u32 %v926, 16
        %v1034 = vrot.slane %v1032, 7
        %v1035 = vshll.u32 %v926, 16
        %v1037 = vor.u32 %v1034, %v1035
        %v1038 = vsel %vm937, %v1030, %v1037
        %v1039 = vrot.slane %v1034, 4
        %v1041 = vshrl.u32 %v927, 16
        %v1043 = vrot.slane %v1041, 7
        %v1044 = vshll.u32 %v927, 16
        %v1046 = vor.u32 %v1043, %v1044
        %v1047 = vrot.slane %v1043, 4
        %v1049 = vshrl.u32 %v928, 16
        %v1051 = vrot.slane %v1049, 7
        %v1052 = vshll.u32 %v928, 16
        %v1054 = vor.u32 %v1051, %v1052
        %v1055 = vsel %vm937, %v1047, %v1054
        %v1056 = vrot.slane %v1051, 4
        %v1058 = vshrl.u32 %v929, 16
        %v1060 = vrot.slane %v1058, 7
        %v1061 = vshll.u32 %v929, 16
        %v1063 = vor.u32 %v1060, %v1061
        %v1064 = vrot.slane %v1060, 4
        %v1066 = vshrl.u32 %v930, 16
        %v1068 = vrot.slane %v1066, 7
        %v1069 = vshll.u32 %v930, 16
        %v1071 = vor.u32 %v1068, %v1069
        %v1072 = vsel %vm937, %v1064, %v1071
        %v1073 = vrot.slane %v1068, 4
        %v1075 = vshrl.u32 %v931, 16
        %v1077 = vrot.slane %v1075, 7
        %v1078 = vshll.u32 %v931, 16
        %v1080 = vor.u32 %v1077, %v1078
        %v1081 = vrot.slane %v1077, 4
        %v1083 = vshrl.u32 %v932, 16
        %v1085 = vrot.slane %v1083, 7
        %v1086 = vshll.u32 %v932, 16
        %v1088 = vor.u32 %v1085, %v1086
        %v1089 = vsel %vm937, %v1081, %v1088
        %v1090 = vrot.slane %v1085, 4
        %v1092 = vshrl.u32 %v933, 16
        %v1094 = vrot.slane %v1092, 7
        %v1095 = vshll.u32 %v933, 16
        %v1097 = vor.u32 %v1094, %v1095
        %v1098 = vrot.slane %v1094, 4
        %v1100 = vshrl.u32 %v934, 16
        %v1102 = vrot.slane %v1100, 7
        %v1103 = vshll.u32 %v934, 16
        %v1105 = vor.u32 %v1102, %v1103
        %v1106 = vsel %vm937, %v1098, %v1105
        %v1107 = vrot.slane %v1102, 4
        %vm1138 = vcmask 1043456
        %vm1139 = vsmask.f32 7938
        %vm1140 = vmand %vm1138, %vm1139
        %v1141 = vld [vmem:[#allocation2] sm:$0xf]
        %v1142 = vsel %vm1140, %v944, %v1141
        %1143 = vst [vmem:[#allocation2] sm:$0xf] %v1142
        %1144 = vst [vmem:[#allocation2 + $0x4] sm:$0xf] %v953
        %vm1145 = vcmask 1040384
        %vm1146 = vmand %vm1145, %vm935
        %v1147 = vld [vmem:[#allocation2 + $0x8] sm:$0x1]
        %v1148 = vsel %vm1146, %v954, %v1147
        %1149 = vst [vmem:[#allocation2 + $0x8] sm:$0x1] %v1148
        %v1150 = vld [vmem:[#allocation2 + $0xc] sm:$0xf]
        %v1151 = vsel %vm1140, %v961, %v1150
        %1152 = vst [vmem:[#allocation2 + $0xc] sm:$0xf] %v1151
        %1153 = vst [vmem:[#allocation2 + $0x10] sm:$0xf] %v970
        %v1154 = vld [vmem:[#allocation2 + $0x14] sm:$0x1]
        %v1155 = vsel %vm1146, %v971, %v1154
        %1156 = vst [vmem:[#allocation2 + $0x14] sm:$0x1] %v1155
        %v1157 = vld [vmem:[#allocation2 + $0x18] sm:$0xf]
        %v1158 = vsel %vm1140, %v978, %v1157
        %1159 = vst [vmem:[#allocation2 + $0x18] sm:$0xf] %v1158
        %1160 = vst [vmem:[#allocation2 + $0x1c] sm:$0xf] %v987
        %v1161 = vld [vmem:[#allocation2 + $0x20] sm:$0x1]
        %v1162 = vsel %vm1146, %v988, %v1161
        %1163 = vst [vmem:[#allocation2 + $0x20] sm:$0x1] %v1162
        %v1164 = vld [vmem:[#allocation2 + $0x24] sm:$0xf]
        %v1165 = vsel %vm1140, %v995, %v1164
        %1166 = vst [vmem:[#allocation2 + $0x24] sm:$0xf] %v1165
        %1167 = vst [vmem:[#allocation2 + $0x28] sm:$0xf] %v1004
        %v1168 = vld [vmem:[#allocation2 + $0x2c] sm:$0x1]
        %v1169 = vsel %vm1146, %v1005, %v1168
        %1170 = vst [vmem:[#allocation2 + $0x2c] sm:$0x1] %v1169
        %v1171 = vld [vmem:[#allocation2 + $0x30] sm:$0xf]
        %v1172 = vsel %vm1140, %v1012, %v1171
        %1173 = vst [vmem:[#allocation2 + $0x30] sm:$0xf] %v1172
        %1174 = vst [vmem:[#allocation2 + $0x34] sm:$0xf] %v1021
        %v1175 = vld [vmem:[#allocation2 + $0x38] sm:$0x1]
        %v1176 = vsel %vm1146, %v1022, %v1175
        %1177 = vst [vmem:[#allocation2 + $0x38] sm:$0x1] %v1176
        %v1178 = vld [vmem:[#allocation2 + $0x3c] sm:$0xf]
        %v1179 = vsel %vm1140, %v1029, %v1178
        %1180 = vst [vmem:[#allocation2 + $0x3c] sm:$0xf] %v1179
        %1181 = vst [vmem:[#allocation2 + $0x40] sm:$0xf] %v1038
        %v1182 = vld [vmem:[#allocation2 + $0x44] sm:$0x1]
        %v1183 = vsel %vm1146, %v1039, %v1182
        %1184 = vst [vmem:[#allocation2 + $0x44] sm:$0x1] %v1183
        %v1185 = vld [vmem:[#allocation2 + $0x48] sm:$0xf]
        %v1186 = vsel %vm1140, %v1046, %v1185
        %1187 = vst [vmem:[#allocation2 + $0x48] sm:$0xf] %v1186
        %1188 = vst [vmem:[#allocation2 + $0x4c] sm:$0xf] %v1055
        %v1189 = vld [vmem:[#allocation2 + $0x50] sm:$0x1]
        %v1190 = vsel %vm1146, %v1056, %v1189
        %1191 = vst [vmem:[#allocation2 + $0x50] sm:$0x1] %v1190
        %v1192 = vld [vmem:[#allocation2 + $0x54] sm:$0xf]
        %v1193 = vsel %vm1140, %v1063, %v1192
        %1194 = vst [vmem:[#allocation2 + $0x54] sm:$0xf] %v1193
        %1195 = vst [vmem:[#allocation2 + $0x58] sm:$0xf] %v1072
        %v1196 = vld [vmem:[#allocation2 + $0x5c] sm:$0x1]
        %v1197 = vsel %vm1146, %v1073, %v1196
        %1198 = vst [vmem:[#allocation2 + $0x5c] sm:$0x1] %v1197
        %v1199 = vld [vmem:[#allocation2 + $0x60] sm:$0xf]
        %v1200 = vsel %vm1140, %v1080, %v1199
        %1201 = vst [vmem:[#allocation2 + $0x60] sm:$0xf] %v1200
        %1202 = vst [vmem:[#allocation2 + $0x64] sm:$0xf] %v1089
        %v1203 = vld [vmem:[#allocation2 + $0x68] sm:$0x1]
        %v1204 = vsel %vm1146, %v1090, %v1203
        %1205 = vst [vmem:[#allocation2 + $0x68] sm:$0x1] %v1204
        %v1206 = vld [vmem:[#allocation2 + $0x6c] sm:$0xf]
        %v1207 = vsel %vm1140, %v1097, %v1206
        %1208 = vst [vmem:[#allocation2 + $0x6c] sm:$0xf] %v1207
        %1209 = vst [vmem:[#allocation2 + $0x70] sm:$0xf] %v1106
        %v1210 = vld [vmem:[#allocation2 + $0x74] sm:$0x1]
        %v1211 = vsel %vm1146, %v1107, %v1210
        %1212 = vst [vmem:[#allocation2 + $0x74] sm:$0x1] %v1211
        %p1213 = scmp.eq.s32.totalorder %s31, 0
        // Predicated region
        $region65: #{tpu_custom_call.1} parent=47 // pred_check
          %p1214 = pneg %p1213
        $region66: #{tpu_custom_call.1} parent=47 // pred_check_branch
          %1216 = sbr.rel (%p1214) target = $region68
        $region67: #{tpu_custom_call.1} parent=47 // pred_region
          %1217 = vst [vmem:[#allocation2] sm:$0xf] 0
          %1218 = vst [vmem:[#allocation2 + $0x4] sm:$0xf] 0
          %1219 = vst [vmem:[#allocation2 + $0x8] sm:$0x1] 0
        $region68: #{tpu_custom_call.1} parent=47 // pred_fallthru
          _
        %p1220 = scmp.eq.s32.totalorder %s31, 1
        // Predicated region
        $region69: #{tpu_custom_call.1} parent=47 // pred_check
          %p1221 = pneg %p1220
        $region70: #{tpu_custom_call.1} parent=47 // pred_check_branch
          %1223 = sbr.rel (%p1221) target = $region72
        $region71: #{tpu_custom_call.1} parent=47 // pred_region
          %s1224 = scalar_lea.vmem [#allocation2], 108
          %1225 = vst [vmem:[%s1224] sm:$0xf] 0
          %1226 = vst [vmem:[%s1224 + $0x4] sm:$0xf] 0
          %1227 = vst [vmem:[%s1224 + $0x8] sm:$0x1] 0
        $region72: #{tpu_custom_call.1} parent=47 // pred_fallthru
          _
        %v1228 = vld [vmem:[#allocation2] sm:$0xf]
        %v1229 = vld [vmem:[#allocation2 + $0x4] sm:$0xf]
        %v1230 = vld [vmem:[#allocation2 + $0xc] sm:$0xf]
        %v1231 = vld [vmem:[#allocation2 + $0x10] sm:$0xf]
        %v1232 = vld [vmem:[#allocation2 + $0x18] sm:$0xf]
        %v1233 = vld [vmem:[#allocation2 + $0x1c] sm:$0xf]
        %v1234 = vld [vmem:[#allocation2 + $0x24] sm:$0xf]
        %v1235 = vld [vmem:[#allocation2 + $0x28] sm:$0xf]
        %v1236 = vld [vmem:[#allocation2 + $0x30] sm:$0xf]
        %v1237 = vld [vmem:[#allocation2 + $0x34] sm:$0xf]
        %v1238 = vld [vmem:[#allocation2 + $0x3c] sm:$0xf]
        %v1239 = vld [vmem:[#allocation2 + $0x40] sm:$0xf]
        %v1240 = vld [vmem:[#allocation2 + $0x48] sm:$0xf]
        %v1241 = vld [vmem:[#allocation2 + $0x4c] sm:$0xf]
        %v1242 = vld [vmem:[#allocation2 + $0x54] sm:$0xf]
        %v1243 = vld [vmem:[#allocation2 + $0x58] sm:$0xf]
        %v1244 = vld [vmem:[#allocation2 + $0x8] sm:$0x1]
        %v1245 = vld [vmem:[#allocation2 + $0x14] sm:$0x1]
        %v1246 = vld [vmem:[#allocation2 + $0x20] sm:$0x1]
        %v1247 = vld [vmem:[#allocation2 + $0x2c] sm:$0x1]
        %v1248 = vld [vmem:[#allocation2 + $0x38] sm:$0x1]
        %v1249 = vld [vmem:[#allocation2 + $0x44] sm:$0x1]
        %v1250 = vld [vmem:[#allocation2 + $0x50] sm:$0x1]
        %v1251 = vld [vmem:[#allocation2 + $0x5c] sm:$0x1]
        %v1252 = vld [vmem:[#allocation2] sm:$0xe]
        %v1253 = vld [vmem:[#allocation2 + $0xc] sm:$0xe]
        %v1254 = vld [vmem:[#allocation2 + $0x18] sm:$0xe]
        %v1255 = vld [vmem:[#allocation2 + $0x24] sm:$0xe]
        %v1256 = vld [vmem:[#allocation2 + $0x30] sm:$0xe]
        %v1257 = vld [vmem:[#allocation2 + $0x3c] sm:$0xe]
        %v1258 = vld [vmem:[#allocation2 + $0x48] sm:$0xe]
        %v1259 = vld [vmem:[#allocation2 + $0x54] sm:$0xe]
        %s1260 = scalar_lea.vmem [#allocation2], 12
        %v1261 = vld [vmem:[%s1260] sm:$0xf]
        %v1262 = vld [vmem:[%s1260 + $0x4] sm:$0xf]
        %v1263 = vld [vmem:[%s1260 + $0xc] sm:$0xf]
        %v1264 = vld [vmem:[%s1260 + $0x10] sm:$0xf]
        %v1265 = vld [vmem:[%s1260 + $0x18] sm:$0xf]
        %v1266 = vld [vmem:[%s1260 + $0x1c] sm:$0xf]
        %v1267 = vld [vmem:[%s1260 + $0x24] sm:$0xf]
        %v1268 = vld [vmem:[%s1260 + $0x28] sm:$0xf]
        %v1269 = vld [vmem:[%s1260 + $0x30] sm:$0xf]
        %v1270 = vld [vmem:[%s1260 + $0x34] sm:$0xf]
        %v1271 = vld [vmem:[%s1260 + $0x3c] sm:$0xf]
        %v1272 = vld [vmem:[%s1260 + $0x40] sm:$0xf]
        %v1273 = vld [vmem:[%s1260 + $0x48] sm:$0xf]
        %v1274 = vld [vmem:[%s1260 + $0x4c] sm:$0xf]
        %v1275 = vld [vmem:[%s1260 + $0x54] sm:$0xf]
        %v1276 = vld [vmem:[%s1260 + $0x58] sm:$0xf]
        %v1277 = vld [vmem:[%s1260 + $0x8] sm:$0x1]
        %v1278 = vld [vmem:[%s1260 + $0x14] sm:$0x1]
        %v1279 = vld [vmem:[%s1260 + $0x20] sm:$0x1]
        %v1280 = vld [vmem:[%s1260 + $0x2c] sm:$0x1]
        %v1281 = vld [vmem:[%s1260 + $0x38] sm:$0x1]
        %v1282 = vld [vmem:[%s1260 + $0x44] sm:$0x1]
        %v1283 = vld [vmem:[%s1260 + $0x50] sm:$0x1]
        %v1284 = vld [vmem:[%s1260 + $0x5c] sm:$0x1]
        %v1285 = vld [vmem:[%s1260] sm:$0xe]
        %v1286 = vld [vmem:[%s1260 + $0xc] sm:$0xe]
        %v1287 = vld [vmem:[%s1260 + $0x18] sm:$0xe]
        %v1288 = vld [vmem:[%s1260 + $0x24] sm:$0xe]
        %v1289 = vld [vmem:[%s1260 + $0x30] sm:$0xe]
        %v1290 = vld [vmem:[%s1260 + $0x3c] sm:$0xe]
        %v1291 = vld [vmem:[%s1260 + $0x48] sm:$0xe]
        %v1292 = vld [vmem:[%s1260 + $0x54] sm:$0xe]
        %s1293 = scalar_lea.vmem [#allocation2], 24
        %v1294 = vld [vmem:[%s1293] sm:$0xf]
        %v1295 = vld [vmem:[%s1293 + $0x4] sm:$0xf]
        %v1296 = vld [vmem:[%s1293 + $0xc] sm:$0xf]
        %v1297 = vld [vmem:[%s1293 + $0x10] sm:$0xf]
        %v1298 = vld [vmem:[%s1293 + $0x18] sm:$0xf]
        %v1299 = vld [vmem:[%s1293 + $0x1c] sm:$0xf]
        %v1300 = vld [vmem:[%s1293 + $0x24] sm:$0xf]
        %v1301 = vld [vmem:[%s1293 + $0x28] sm:$0xf]
        %v1302 = vld [vmem:[%s1293 + $0x30] sm:$0xf]
        %v1303 = vld [vmem:[%s1293 + $0x34] sm:$0xf]
        %v1304 = vld [vmem:[%s1293 + $0x3c] sm:$0xf]
        %v1305 = vld [vmem:[%s1293 + $0x40] sm:$0xf]
        %v1306 = vld [vmem:[%s1293 + $0x48] sm:$0xf]
        %v1307 = vld [vmem:[%s1293 + $0x4c] sm:$0xf]
        %v1308 = vld [vmem:[%s1293 + $0x54] sm:$0xf]
        %v1309 = vld [vmem:[%s1293 + $0x58] sm:$0xf]
        %v1310 = vld [vmem:[%s1293 + $0x8] sm:$0x1]
        %v1311 = vld [vmem:[%s1293 + $0x14] sm:$0x1]
        %v1312 = vld [vmem:[%s1293 + $0x20] sm:$0x1]
        %v1313 = vld [vmem:[%s1293 + $0x2c] sm:$0x1]
        %v1314 = vld [vmem:[%s1293 + $0x38] sm:$0x1]
        %v1315 = vld [vmem:[%s1293 + $0x44] sm:$0x1]
        %v1316 = vld [vmem:[%s1293 + $0x50] sm:$0x1]
        %v1317 = vld [vmem:[%s1293 + $0x5c] sm:$0x1]
        %v1318 = vld [vmem:[%s1293] sm:$0xe]
        %v1319 = vld [vmem:[%s1293 + $0xc] sm:$0xe]
        %v1320 = vld [vmem:[%s1293 + $0x18] sm:$0xe]
        %v1321 = vld [vmem:[%s1293 + $0x24] sm:$0xe]
        %v1322 = vld [vmem:[%s1293 + $0x30] sm:$0xe]
        %v1323 = vld [vmem:[%s1293 + $0x3c] sm:$0xe]
        %v1324 = vld [vmem:[%s1293 + $0x48] sm:$0xe]
        %v1325 = vld [vmem:[%s1293 + $0x54] sm:$0xe]
        %v1342 = vunpack.c.l.b16 %v1228
        %v1343 = vunpack.c.l.b16 %v1229
        %v1344 = vunpack.c.l.b16 %v1230
        %v1345 = vunpack.c.l.b16 %v1231
        %v1346 = vunpack.c.l.b16 %v1232
        %v1347 = vunpack.c.l.b16 %v1233
        %v1348 = vunpack.c.l.b16 %v1234
        %v1349 = vunpack.c.l.b16 %v1235
        %v1350 = vunpack.c.l.b16 %v1236
        %v1351 = vunpack.c.l.b16 %v1237
        %v1352 = vunpack.c.l.b16 %v1238
        %v1353 = vunpack.c.l.b16 %v1239
        %v1354 = vunpack.c.l.b16 %v1240
        %v1355 = vunpack.c.l.b16 %v1241
        %v1356 = vunpack.c.l.b16 %v1242
        %v1357 = vunpack.c.l.b16 %v1243
        %v1358 = vpack.c.b16 %v1343, %v1342
        %v1359 = vpack.c.b16 %v1345, %v1344
        %v1360 = vpack.c.b16 %v1347, %v1346
        %v1361 = vpack.c.b16 %v1349, %v1348
        %v1362 = vpack.c.b16 %v1351, %v1350
        %v1363 = vpack.c.b16 %v1353, %v1352
        %v1364 = vpack.c.b16 %v1355, %v1354
        %v1365 = vpack.c.b16 %v1357, %v1356
        %v1382 = vunpack.c.l.b16 %v1244
        %v1383 = vunpack.c.l.b16 %v1245
        %v1384 = vunpack.c.l.b16 %v1246
        %v1385 = vunpack.c.l.b16 %v1247
        %v1386 = vunpack.c.l.b16 %v1248
        %v1387 = vunpack.c.l.b16 %v1249
        %v1388 = vunpack.c.l.b16 %v1250
        %v1389 = vunpack.c.l.b16 %v1251
        %v1390 = vpack.c.b16 %v1382, %v1382
        %v1391 = vpack.c.b16 %v1383, %v1383
        %v1392 = vpack.c.b16 %v1384, %v1384
        %v1393 = vpack.c.b16 %v1385, %v1385
        %v1394 = vpack.c.b16 %v1386, %v1386
        %v1395 = vpack.c.b16 %v1387, %v1387
        %v1396 = vpack.c.b16 %v1388, %v1388
        %v1397 = vpack.c.b16 %v1389, %v1389
        %vm1398 = vsmask.f32 7424
        %v1400 = vshrl.u32 %v1358, 16
        %v1402 = vshll.u32 %v1358, 16
        %v1404 = vrot.slane %v1402, 1
        %v1405 = vor.u32 %v1400, %v1404
        %v1407 = vshll.u32 %v1390, 16
        %v1409 = vrot.slane %v1407, 1
        %v1410 = vsel %vm1398, %v1405, %v1409
        %v1412 = vshrl.u32 %v1359, 16
        %v1414 = vshll.u32 %v1359, 16
        %v1416 = vrot.slane %v1414, 1
        %v1417 = vor.u32 %v1412, %v1416
        %v1419 = vshll.u32 %v1391, 16
        %v1421 = vrot.slane %v1419, 1
        %v1422 = vsel %vm1398, %v1417, %v1421
        %v1424 = vshrl.u32 %v1360, 16
        %v1426 = vshll.u32 %v1360, 16
        %v1428 = vrot.slane %v1426, 1
        %v1429 = vor.u32 %v1424, %v1428
        %v1431 = vshll.u32 %v1392, 16
        %v1433 = vrot.slane %v1431, 1
        %v1434 = vsel %vm1398, %v1429, %v1433
        %v1436 = vshrl.u32 %v1361, 16
        %v1438 = vshll.u32 %v1361, 16
        %v1440 = vrot.slane %v1438, 1
        %v1441 = vor.u32 %v1436, %v1440
        %v1443 = vshll.u32 %v1393, 16
        %v1445 = vrot.slane %v1443, 1
        %v1446 = vsel %vm1398, %v1441, %v1445
        %v1448 = vshrl.u32 %v1362, 16
        %v1450 = vshll.u32 %v1362, 16
        %v1452 = vrot.slane %v1450, 1
        %v1453 = vor.u32 %v1448, %v1452
        %v1455 = vshll.u32 %v1394, 16
        %v1457 = vrot.slane %v1455, 1
        %v1458 = vsel %vm1398, %v1453, %v1457
        %v1460 = vshrl.u32 %v1363, 16
        %v1462 = vshll.u32 %v1363, 16
        %v1464 = vrot.slane %v1462, 1
        %v1465 = vor.u32 %v1460, %v1464
        %v1467 = vshll.u32 %v1395, 16
        %v1469 = vrot.slane %v1467, 1
        %v1470 = vsel %vm1398, %v1465, %v1469
        %v1472 = vshrl.u32 %v1364, 16
        %v1474 = vshll.u32 %v1364, 16
        %v1476 = vrot.slane %v1474, 1
        %v1477 = vor.u32 %v1472, %v1476
        %v1479 = vshll.u32 %v1396, 16
        %v1481 = vrot.slane %v1479, 1
        %v1482 = vsel %vm1398, %v1477, %v1481
        %v1484 = vshrl.u32 %v1365, 16
        %v1486 = vshll.u32 %v1365, 16
        %v1488 = vrot.slane %v1486, 1
        %v1489 = vor.u32 %v1484, %v1488
        %v1491 = vshll.u32 %v1397, 16
        %v1493 = vrot.slane %v1491, 1
        %v1494 = vsel %vm1398, %v1489, %v1493
        %v1511 = vunpack.c.l.b16 %v1252
        %v1512 = vunpack.c.l.b16 %v1253
        %v1513 = vunpack.c.l.b16 %v1254
        %v1514 = vunpack.c.l.b16 %v1255
        %v1515 = vunpack.c.l.b16 %v1256
        %v1516 = vunpack.c.l.b16 %v1257
        %v1517 = vunpack.c.l.b16 %v1258
        %v1518 = vunpack.c.l.b16 %v1259
        %v1519 = vpack.c.b16 %v1343, %v1511
        %v1520 = vpack.c.b16 %v1345, %v1512
        %v1521 = vpack.c.b16 %v1347, %v1513
        %v1522 = vpack.c.b16 %v1349, %v1514
        %v1523 = vpack.c.b16 %v1351, %v1515
        %v1524 = vpack.c.b16 %v1353, %v1516
        %v1525 = vpack.c.b16 %v1355, %v1517
        %v1526 = vpack.c.b16 %v1357, %v1518
        %vm1527 = vcmask 1046528
        %v1528 = vrot.slane %v1519, 1
        %v1529 = vrot.slane %v1390, 1
        %v1530 = vsel %vm1527, %v1528, %v1529
        %v1531 = vrot.slane %v1520, 1
        %v1532 = vrot.slane %v1391, 1
        %v1533 = vsel %vm1527, %v1531, %v1532
        %v1534 = vrot.slane %v1521, 1
        %v1535 = vrot.slane %v1392, 1
        %v1536 = vsel %vm1527, %v1534, %v1535
        %v1537 = vrot.slane %v1522, 1
        %v1538 = vrot.slane %v1393, 1
        %v1539 = vsel %vm1527, %v1537, %v1538
        %v1540 = vrot.slane %v1523, 1
        %v1541 = vrot.slane %v1394, 1
        %v1542 = vsel %vm1527, %v1540, %v1541
        %v1543 = vrot.slane %v1524, 1
        %v1544 = vrot.slane %v1395, 1
        %v1545 = vsel %vm1527, %v1543, %v1544
        %v1546 = vrot.slane %v1525, 1
        %v1547 = vrot.slane %v1396, 1
        %v1548 = vsel %vm1527, %v1546, %v1547
        %v1549 = vrot.slane %v1526, 1
        %v1550 = vrot.slane %v1397, 1
        %v1551 = vsel %vm1527, %v1549, %v1550
        %v1576 = vunpack.c.l.b16 %v1261
        %v1577 = vunpack.c.l.b16 %v1262
        %v1578 = vunpack.c.l.b16 %v1263
        %v1579 = vunpack.c.l.b16 %v1264
        %v1580 = vunpack.c.l.b16 %v1265
        %v1581 = vunpack.c.l.b16 %v1266
        %v1582 = vunpack.c.l.b16 %v1267
        %v1583 = vunpack.c.l.b16 %v1268
        %v1584 = vunpack.c.l.b16 %v1269
        %v1585 = vunpack.c.l.b16 %v1270
        %v1586 = vunpack.c.l.b16 %v1271
        %v1587 = vunpack.c.l.b16 %v1272
        %v1588 = vunpack.c.l.b16 %v1273
        %v1589 = vunpack.c.l.b16 %v1274
        %v1590 = vunpack.c.l.b16 %v1275
        %v1591 = vunpack.c.l.b16 %v1276
        %v1592 = vpack.c.b16 %v1577, %v1576
        %v1593 = vpack.c.b16 %v1579, %v1578
        %v1594 = vpack.c.b16 %v1581, %v1580
        %v1595 = vpack.c.b16 %v1583, %v1582
        %v1596 = vpack.c.b16 %v1585, %v1584
        %v1597 = vpack.c.b16 %v1587, %v1586
        %v1598 = vpack.c.b16 %v1589, %v1588
        %v1599 = vpack.c.b16 %v1591, %v1590
        %v1616 = vunpack.c.l.b16 %v1277
        %v1617 = vunpack.c.l.b16 %v1278
        %v1618 = vunpack.c.l.b16 %v1279
        %v1619 = vunpack.c.l.b16 %v1280
        %v1620 = vunpack.c.l.b16 %v1281
        %v1621 = vunpack.c.l.b16 %v1282
        %v1622 = vunpack.c.l.b16 %v1283
        %v1623 = vunpack.c.l.b16 %v1284
        %v1624 = vpack.c.b16 %v1616, %v1616
        %v1625 = vpack.c.b16 %v1617, %v1617
        %v1626 = vpack.c.b16 %v1618, %v1618
        %v1627 = vpack.c.b16 %v1619, %v1619
        %v1628 = vpack.c.b16 %v1620, %v1620
        %v1629 = vpack.c.b16 %v1621, %v1621
        %v1630 = vpack.c.b16 %v1622, %v1622
        %v1631 = vpack.c.b16 %v1623, %v1623
        %v1633 = vshrl.u32 %v1592, 16
        %v1635 = vshll.u32 %v1592, 16
        %v1637 = vrot.slane %v1635, 1
        %v1638 = vor.u32 %v1633, %v1637
        %v1640 = vshll.u32 %v1624, 16
        %v1642 = vrot.slane %v1640, 1
        %v1643 = vsel %vm1398, %v1638, %v1642
        %v1645 = vshrl.u32 %v1593, 16
        %v1647 = vshll.u32 %v1593, 16
        %v1649 = vrot.slane %v1647, 1
        %v1650 = vor.u32 %v1645, %v1649
        %v1652 = vshll.u32 %v1625, 16
        %v1654 = vrot.slane %v1652, 1
        %v1655 = vsel %vm1398, %v1650, %v1654
        %v1657 = vshrl.u32 %v1594, 16
        %v1659 = vshll.u32 %v1594, 16
        %v1661 = vrot.slane %v1659, 1
        %v1662 = vor.u32 %v1657, %v1661
        %v1664 = vshll.u32 %v1626, 16
        %v1666 = vrot.slane %v1664, 1
        %v1667 = vsel %vm1398, %v1662, %v1666
        %v1669 = vshrl.u32 %v1595, 16
        %v1671 = vshll.u32 %v1595, 16
        %v1673 = vrot.slane %v1671, 1
        %v1674 = vor.u32 %v1669, %v1673
        %v1676 = vshll.u32 %v1627, 16
        %v1678 = vrot.slane %v1676, 1
        %v1679 = vsel %vm1398, %v1674, %v1678
        %v1681 = vshrl.u32 %v1596, 16
        %v1683 = vshll.u32 %v1596, 16
        %v1685 = vrot.slane %v1683, 1
        %v1686 = vor.u32 %v1681, %v1685
        %v1688 = vshll.u32 %v1628, 16
        %v1690 = vrot.slane %v1688, 1
        %v1691 = vsel %vm1398, %v1686, %v1690
        %v1693 = vshrl.u32 %v1597, 16
        %v1695 = vshll.u32 %v1597, 16
        %v1697 = vrot.slane %v1695, 1
        %v1698 = vor.u32 %v1693, %v1697
        %v1700 = vshll.u32 %v1629, 16
        %v1702 = vrot.slane %v1700, 1
        %v1703 = vsel %vm1398, %v1698, %v1702
        %v1705 = vshrl.u32 %v1598, 16
        %v1707 = vshll.u32 %v1598, 16
        %v1709 = vrot.slane %v1707, 1
        %v1710 = vor.u32 %v1705, %v1709
        %v1712 = vshll.u32 %v1630, 16
        %v1714 = vrot.slane %v1712, 1
        %v1715 = vsel %vm1398, %v1710, %v1714
        %v1717 = vshrl.u32 %v1599, 16
        %v1719 = vshll.u32 %v1599, 16
        %v1721 = vrot.slane %v1719, 1
        %v1722 = vor.u32 %v1717, %v1721
        %v1724 = vshll.u32 %v1631, 16
        %v1726 = vrot.slane %v1724, 1
        %v1727 = vsel %vm1398, %v1722, %v1726
        %v1744 = vunpack.c.l.b16 %v1285
        %v1745 = vunpack.c.l.b16 %v1286
        %v1746 = vunpack.c.l.b16 %v1287
        %v1747 = vunpack.c.l.b16 %v1288
        %v1748 = vunpack.c.l.b16 %v1289
        %v1749 = vunpack.c.l.b16 %v1290
        %v1750 = vunpack.c.l.b16 %v1291
        %v1751 = vunpack.c.l.b16 %v1292
        %v1752 = vpack.c.b16 %v1577, %v1744
        %v1753 = vpack.c.b16 %v1579, %v1745
        %v1754 = vpack.c.b16 %v1581, %v1746
        %v1755 = vpack.c.b16 %v1583, %v1747
        %v1756 = vpack.c.b16 %v1585, %v1748
        %v1757 = vpack.c.b16 %v1587, %v1749
        %v1758 = vpack.c.b16 %v1589, %v1750
        %v1759 = vpack.c.b16 %v1591, %v1751
        %v1760 = vrot.slane %v1752, 1
        %v1761 = vrot.slane %v1624, 1
        %v1762 = vsel %vm1527, %v1760, %v1761
        %v1763 = vrot.slane %v1753, 1
        %v1764 = vrot.slane %v1625, 1
        %v1765 = vsel %vm1527, %v1763, %v1764
        %v1766 = vrot.slane %v1754, 1
        %v1767 = vrot.slane %v1626, 1
        %v1768 = vsel %vm1527, %v1766, %v1767
        %v1769 = vrot.slane %v1755, 1
        %v1770 = vrot.slane %v1627, 1
        %v1771 = vsel %vm1527, %v1769, %v1770
        %v1772 = vrot.slane %v1756, 1
        %v1773 = vrot.slane %v1628, 1
        %v1774 = vsel %vm1527, %v1772, %v1773
        %v1775 = vrot.slane %v1757, 1
        %v1776 = vrot.slane %v1629, 1
        %v1777 = vsel %vm1527, %v1775, %v1776
        %v1778 = vrot.slane %v1758, 1
        %v1779 = vrot.slane %v1630, 1
        %v1780 = vsel %vm1527, %v1778, %v1779
        %v1781 = vrot.slane %v1759, 1
        %v1782 = vrot.slane %v1631, 1
        %v1783 = vsel %vm1527, %v1781, %v1782
        %v1808 = vunpack.c.l.b16 %v1294
        %v1809 = vunpack.c.l.b16 %v1295
        %v1810 = vunpack.c.l.b16 %v1296
        %v1811 = vunpack.c.l.b16 %v1297
        %v1812 = vunpack.c.l.b16 %v1298
        %v1813 = vunpack.c.l.b16 %v1299
        %v1814 = vunpack.c.l.b16 %v1300
        %v1815 = vunpack.c.l.b16 %v1301
        %v1816 = vunpack.c.l.b16 %v1302
        %v1817 = vunpack.c.l.b16 %v1303
        %v1818 = vunpack.c.l.b16 %v1304
        %v1819 = vunpack.c.l.b16 %v1305
        %v1820 = vunpack.c.l.b16 %v1306
        %v1821 = vunpack.c.l.b16 %v1307
        %v1822 = vunpack.c.l.b16 %v1308
        %v1823 = vunpack.c.l.b16 %v1309
        %v1824 = vpack.c.b16 %v1809, %v1808
        %v1825 = vpack.c.b16 %v1811, %v1810
        %v1826 = vpack.c.b16 %v1813, %v1812
        %v1827 = vpack.c.b16 %v1815, %v1814
        %v1828 = vpack.c.b16 %v1817, %v1816
        %v1829 = vpack.c.b16 %v1819, %v1818
        %v1830 = vpack.c.b16 %v1821, %v1820
        %v1831 = vpack.c.b16 %v1823, %v1822
        %v1848 = vunpack.c.l.b16 %v1310
        %v1849 = vunpack.c.l.b16 %v1311
        %v1850 = vunpack.c.l.b16 %v1312
        %v1851 = vunpack.c.l.b16 %v1313
        %v1852 = vunpack.c.l.b16 %v1314
        %v1853 = vunpack.c.l.b16 %v1315
        %v1854 = vunpack.c.l.b16 %v1316
        %v1855 = vunpack.c.l.b16 %v1317
        %v1856 = vpack.c.b16 %v1848, %v1848
        %v1857 = vpack.c.b16 %v1849, %v1849
        %v1858 = vpack.c.b16 %v1850, %v1850
        %v1859 = vpack.c.b16 %v1851, %v1851
        %v1860 = vpack.c.b16 %v1852, %v1852
        %v1861 = vpack.c.b16 %v1853, %v1853
        %v1862 = vpack.c.b16 %v1854, %v1854
        %v1863 = vpack.c.b16 %v1855, %v1855
        %v1865 = vshrl.u32 %v1824, 16
        %v1867 = vshll.u32 %v1824, 16
        %v1869 = vrot.slane %v1867, 1
        %v1870 = vor.u32 %v1865, %v1869
        %v1872 = vshll.u32 %v1856, 16
        %v1874 = vrot.slane %v1872, 1
        %v1875 = vsel %vm1398, %v1870, %v1874
        %v1877 = vshrl.u32 %v1825, 16
        %v1879 = vshll.u32 %v1825, 16
        %v1881 = vrot.slane %v1879, 1
        %v1882 = vor.u32 %v1877, %v1881
        %v1884 = vshll.u32 %v1857, 16
        %v1886 = vrot.slane %v1884, 1
        %v1887 = vsel %vm1398, %v1882, %v1886
        %v1889 = vshrl.u32 %v1826, 16
        %v1891 = vshll.u32 %v1826, 16
        %v1893 = vrot.slane %v1891, 1
        %v1894 = vor.u32 %v1889, %v1893
        %v1896 = vshll.u32 %v1858, 16
        %v1898 = vrot.slane %v1896, 1
        %v1899 = vsel %vm1398, %v1894, %v1898
        %v1901 = vshrl.u32 %v1827, 16
        %v1903 = vshll.u32 %v1827, 16
        %v1905 = vrot.slane %v1903, 1
        %v1906 = vor.u32 %v1901, %v1905
        %v1908 = vshll.u32 %v1859, 16
        %v1910 = vrot.slane %v1908, 1
        %v1911 = vsel %vm1398, %v1906, %v1910
        %v1913 = vshrl.u32 %v1828, 16
        %v1915 = vshll.u32 %v1828, 16
        %v1917 = vrot.slane %v1915, 1
        %v1918 = vor.u32 %v1913, %v1917
        %v1920 = vshll.u32 %v1860, 16
        %v1922 = vrot.slane %v1920, 1
        %v1923 = vsel %vm1398, %v1918, %v1922
        %v1925 = vshrl.u32 %v1829, 16
        %v1927 = vshll.u32 %v1829, 16
        %v1929 = vrot.slane %v1927, 1
        %v1930 = vor.u32 %v1925, %v1929
        %v1932 = vshll.u32 %v1861, 16
        %v1934 = vrot.slane %v1932, 1
        %v1935 = vsel %vm1398, %v1930, %v1934
        %v1937 = vshrl.u32 %v1830, 16
        %v1939 = vshll.u32 %v1830, 16
        %v1941 = vrot.slane %v1939, 1
        %v1942 = vor.u32 %v1937, %v1941
        %v1944 = vshll.u32 %v1862, 16
        %v1946 = vrot.slane %v1944, 1
        %v1947 = vsel %vm1398, %v1942, %v1946
        %v1949 = vshrl.u32 %v1831, 16
        %v1951 = vshll.u32 %v1831, 16
        %v1953 = vrot.slane %v1951, 1
        %v1954 = vor.u32 %v1949, %v1953
        %v1956 = vshll.u32 %v1863, 16
        %v1958 = vrot.slane %v1956, 1
        %v1959 = vsel %vm1398, %v1954, %v1958
        %v1976 = vunpack.c.l.b16 %v1318
        %v1977 = vunpack.c.l.b16 %v1319
        %v1978 = vunpack.c.l.b16 %v1320
        %v1979 = vunpack.c.l.b16 %v1321
        %v1980 = vunpack.c.l.b16 %v1322
        %v1981 = vunpack.c.l.b16 %v1323
        %v1982 = vunpack.c.l.b16 %v1324
        %v1983 = vunpack.c.l.b16 %v1325
        %v1984 = vpack.c.b16 %v1809, %v1976
        %v1985 = vpack.c.b16 %v1811, %v1977
        %v1986 = vpack.c.b16 %v1813, %v1978
        %v1987 = vpack.c.b16 %v1815, %v1979
        %v1988 = vpack.c.b16 %v1817, %v1980
        %v1989 = vpack.c.b16 %v1819, %v1981
        %v1990 = vpack.c.b16 %v1821, %v1982
        %v1991 = vpack.c.b16 %v1823, %v1983
        %v1992 = vrot.slane %v1984, 1
        %v1993 = vrot.slane %v1856, 1
        %v1994 = vsel %vm1527, %v1992, %v1993
        %v1995 = vrot.slane %v1985, 1
        %v1996 = vrot.slane %v1857, 1
        %v1997 = vsel %vm1527, %v1995, %v1996
        %v1998 = vrot.slane %v1986, 1
        %v1999 = vrot.slane %v1858, 1
        %v2000 = vsel %vm1527, %v1998, %v1999
        %v2001 = vrot.slane %v1987, 1
        %v2002 = vrot.slane %v1859, 1
        %v2003 = vsel %vm1527, %v2001, %v2002
        %v2004 = vrot.slane %v1988, 1
        %v2005 = vrot.slane %v1860, 1
        %v2006 = vsel %vm1527, %v2004, %v2005
        %v2007 = vrot.slane %v1989, 1
        %v2008 = vrot.slane %v1861, 1
        %v2009 = vsel %vm1527, %v2007, %v2008
        %v2010 = vrot.slane %v1990, 1
        %v2011 = vrot.slane %v1862, 1
        %v2012 = vsel %vm1527, %v2010, %v2011
        %v2013 = vrot.slane %v1991, 1
        %v2014 = vrot.slane %v1863, 1
        %v2015 = vsel %vm1527, %v2013, %v2014
        %v2024 = vld [vmem:[#allocation9] sm:$0xf]
        %v2025 = vld [vmem:[#allocation9 + $0x4] sm:$0xf]
        %v2026 = vld [vmem:[#allocation9 + $0x8] sm:$0xf]
        %v2027 = vld [vmem:[#allocation9 + $0xc] sm:$0xf]
        %v2028 = vld [vmem:[#allocation9 + $0x10] sm:$0xf]
        %v2029 = vld [vmem:[#allocation9 + $0x14] sm:$0xf]
        %v2030 = vld [vmem:[#allocation9 + $0x18] sm:$0xf]
        %v2031 = vld [vmem:[#allocation9 + $0x1c] sm:$0xf]
        %v2032 = vld [vmem:[#allocation9 + $0x20] sm:$0xf]
        %v2033 = vld [vmem:[#allocation9 + $0x24] sm:$0xf]
        %v2034 = vld [vmem:[#allocation9 + $0x28] sm:$0xf]
        %v2035 = vld [vmem:[#allocation9 + $0x2c] sm:$0xf]
        %v2036 = vld [vmem:[#allocation9 + $0x30] sm:$0xf]
        %v2037 = vld [vmem:[#allocation9 + $0x34] sm:$0xf]
        %v2038 = vld [vmem:[#allocation9 + $0x38] sm:$0xf]
        %v2039 = vld [vmem:[#allocation9 + $0x3c] sm:$0xf]
        %v2040 = vld [vmem:[#allocation9 + $0x40] sm:$0xf]
        %v2041 = vld [vmem:[#allocation9 + $0x44] sm:$0xf]
        %v2042 = vld [vmem:[#allocation9 + $0x48] sm:$0xf]
        %v2043 = vld [vmem:[#allocation9 + $0x4c] sm:$0xf]
        %v2044 = vld [vmem:[#allocation9 + $0x50] sm:$0xf]
        %v2045 = vld [vmem:[#allocation9 + $0x54] sm:$0xf]
        %v2046 = vld [vmem:[#allocation9 + $0x58] sm:$0xf]
        %v2047 = vld [vmem:[#allocation9 + $0x5c] sm:$0xf]
        %v2048 = vld [vmem:[#allocation9 + $0x60] sm:$0xf]
        %v2049 = vld [vmem:[#allocation9 + $0x64] sm:$0xf]
        %v2050 = vld [vmem:[#allocation9 + $0x68] sm:$0xf]
        %v2051 = vld [vmem:[#allocation9 + $0x6c] sm:$0xf]
        %v2052 = vld [vmem:[#allocation9 + $0x70] sm:$0xf]
        %v2053 = vld [vmem:[#allocation9 + $0x74] sm:$0xf]
        %v2054 = vld [vmem:[#allocation9 + $0x78] sm:$0xf]
        %v2055 = vld [vmem:[#allocation9 + $0x7c] sm:$0xf]
        %v2056 = vld [vmem:[#allocation9 + $0x80] sm:$0xf]
        %v2057 = vld [vmem:[#allocation9 + $0x84] sm:$0xf]
        %v2058 = vld [vmem:[#allocation9 + $0x88] sm:$0xf]
        %v2059 = vld [vmem:[#allocation9 + $0x8c] sm:$0xf]
        %v2060 = vld [vmem:[#allocation9 + $0x90] sm:$0xf]
        %v2061 = vld [vmem:[#allocation9 + $0x94] sm:$0xf]
        %v2062 = vld [vmem:[#allocation9 + $0x98] sm:$0xf]
        %v2063 = vld [vmem:[#allocation9 + $0x9c] sm:$0xf]
        %v2064 = vld [vmem:[#allocation9 + $0xa0] sm:$0xf]
        %v2065 = vld [vmem:[#allocation9 + $0xa4] sm:$0xf]
        %v2066 = vld [vmem:[#allocation9 + $0xa8] sm:$0xf]
        %v2067 = vld [vmem:[#allocation9 + $0xac] sm:$0xf]
        %v2068 = vld [vmem:[#allocation9 + $0xb0] sm:$0xf]
        %v2069 = vld [vmem:[#allocation9 + $0xb4] sm:$0xf]
        %v2070 = vld [vmem:[#allocation9 + $0xb8] sm:$0xf]
        %v2071 = vld [vmem:[#allocation9 + $0xbc] sm:$0xf]
        %v2072 = vld [vmem:[#allocation9 + $0xc0] sm:$0xf]
        %v2073 = vld [vmem:[#allocation9 + $0xc4] sm:$0xf]
        %v2074 = vld [vmem:[#allocation9 + $0xc8] sm:$0xf]
        %v2075 = vld [vmem:[#allocation9 + $0xcc] sm:$0xf]
        %v2076 = vld [vmem:[#allocation9 + $0xd0] sm:$0xf]
        %v2077 = vld [vmem:[#allocation9 + $0xd4] sm:$0xf]
        %v2078 = vld [vmem:[#allocation9 + $0xd8] sm:$0xf]
        %v2079 = vld [vmem:[#allocation9 + $0xdc] sm:$0xf]
        %v2080 = vld [vmem:[#allocation9 + $0xe0] sm:$0xf]
        %v2081 = vld [vmem:[#allocation9 + $0xe4] sm:$0xf]
        %v2082 = vld [vmem:[#allocation9 + $0xe8] sm:$0xf]
        %v2083 = vld [vmem:[#allocation9 + $0xec] sm:$0xf]
        %v2084 = vld [vmem:[#allocation9 + $0xf0] sm:$0xf]
        %v2085 = vld [vmem:[#allocation9 + $0xf4] sm:$0xf]
        %v2086 = vld [vmem:[#allocation9 + $0xf8] sm:$0xf]
        %v2087 = vld [vmem:[#allocation9 + $0xfc] sm:$0xf]
        %v2088 = vld [vmem:[#allocation9 + $0x100] sm:$0xf]
        %v2089 = vld [vmem:[#allocation9 + $0x104] sm:$0xf]
        %v2090 = vld [vmem:[#allocation9 + $0x108] sm:$0xf]
        %v2091 = vld [vmem:[#allocation9 + $0x10c] sm:$0xf]
        %v2092 = vld [vmem:[#allocation9 + $0x110] sm:$0xf]
        %v2093 = vld [vmem:[#allocation9 + $0x114] sm:$0xf]
        %v2094 = vld [vmem:[#allocation9 + $0x118] sm:$0xf]
        %v2095 = vld [vmem:[#allocation9 + $0x11c] sm:$0xf]
        %v2096 = vld [vmem:[#allocation9 + $0x120] sm:$0xf]
        %v2097 = vld [vmem:[#allocation9 + $0x124] sm:$0xf]
        %v2098 = vld [vmem:[#allocation9 + $0x128] sm:$0xf]
        %v2099 = vld [vmem:[#allocation9 + $0x12c] sm:$0xf]
        %v2100 = vld [vmem:[#allocation9 + $0x130] sm:$0xf]
        %v2101 = vld [vmem:[#allocation9 + $0x134] sm:$0xf]
        %v2102 = vld [vmem:[#allocation9 + $0x138] sm:$0xf]
        %v2103 = vld [vmem:[#allocation9 + $0x13c] sm:$0xf]
        %v2104 = vld [vmem:[#allocation9 + $0x140] sm:$0xf]
        %v2105 = vld [vmem:[#allocation9 + $0x144] sm:$0xf]
        %v2106 = vld [vmem:[#allocation9 + $0x148] sm:$0xf]
        %v2107 = vld [vmem:[#allocation9 + $0x14c] sm:$0xf]
        %v2108 = vld [vmem:[#allocation9 + $0x150] sm:$0xf]
        %v2109 = vld [vmem:[#allocation9 + $0x154] sm:$0xf]
        %v2110 = vld [vmem:[#allocation9 + $0x158] sm:$0xf]
        %v2111 = vld [vmem:[#allocation9 + $0x15c] sm:$0xf]
        %v2112 = vld [vmem:[#allocation9 + $0x160] sm:$0xf]
        %v2113 = vld [vmem:[#allocation9 + $0x164] sm:$0xf]
        %v2114 = vld [vmem:[#allocation9 + $0x168] sm:$0xf]
        %v2115 = vld [vmem:[#allocation9 + $0x16c] sm:$0xf]
        %v2116 = vld [vmem:[#allocation9 + $0x170] sm:$0xf]
        %v2117 = vld [vmem:[#allocation9 + $0x174] sm:$0xf]
        %v2118 = vld [vmem:[#allocation9 + $0x178] sm:$0xf]
        %v2119 = vld [vmem:[#allocation9 + $0x17c] sm:$0xf]
        %v2120 = vld [vmem:[#allocation9 + $0x180] sm:$0xf]
        %v2121 = vld [vmem:[#allocation9 + $0x184] sm:$0xf]
        %v2122 = vld [vmem:[#allocation9 + $0x188] sm:$0xf]
        %v2123 = vld [vmem:[#allocation9 + $0x18c] sm:$0xf]
        %v2124 = vld [vmem:[#allocation9 + $0x190] sm:$0xf]
        %v2125 = vld [vmem:[#allocation9 + $0x194] sm:$0xf]
        %v2126 = vld [vmem:[#allocation9 + $0x198] sm:$0xf]
        %v2127 = vld [vmem:[#allocation9 + $0x19c] sm:$0xf]
        %v2128 = vld [vmem:[#allocation9 + $0x1a0] sm:$0xf]
        %v2129 = vld [vmem:[#allocation9 + $0x1a4] sm:$0xf]
        %v2130 = vld [vmem:[#allocation9 + $0x1a8] sm:$0xf]
        %v2131 = vld [vmem:[#allocation9 + $0x1ac] sm:$0xf]
        %v2132 = vld [vmem:[#allocation9 + $0x1b0] sm:$0xf]
        %v2133 = vld [vmem:[#allocation9 + $0x1b4] sm:$0xf]
        %v2134 = vld [vmem:[#allocation9 + $0x1b8] sm:$0xf]
        %v2135 = vld [vmem:[#allocation9 + $0x1bc] sm:$0xf]
        %v2136 = vld [vmem:[#allocation9 + $0x1c0] sm:$0xf]
        %v2137 = vld [vmem:[#allocation9 + $0x1c4] sm:$0xf]
        %v2138 = vld [vmem:[#allocation9 + $0x1c8] sm:$0xf]
        %v2139 = vld [vmem:[#allocation9 + $0x1cc] sm:$0xf]
        %v2140 = vld [vmem:[#allocation9 + $0x1d0] sm:$0xf]
        %v2141 = vld [vmem:[#allocation9 + $0x1d4] sm:$0xf]
        %v2142 = vld [vmem:[#allocation9 + $0x1d8] sm:$0xf]
        %v2143 = vld [vmem:[#allocation9 + $0x1dc] sm:$0xf]
        %v2144 = vld [vmem:[#allocation9 + $0x1e0] sm:$0xf]
        %v2145 = vld [vmem:[#allocation9 + $0x1e4] sm:$0xf]
        %v2146 = vld [vmem:[#allocation9 + $0x1e8] sm:$0xf]
        %v2147 = vld [vmem:[#allocation9 + $0x1ec] sm:$0xf]
        %v2148 = vld [vmem:[#allocation9 + $0x1f0] sm:$0xf]
        %v2149 = vld [vmem:[#allocation9 + $0x1f4] sm:$0xf]
        %v2150 = vld [vmem:[#allocation9 + $0x1f8] sm:$0xf]
        %v2151 = vld [vmem:[#allocation9 + $0x1fc] sm:$0xf]
        %v2152 = vld [vmem:[#allocation9 + $0x200] sm:$0xf]
        %v2153 = vld [vmem:[#allocation9 + $0x204] sm:$0xf]
        %v2154 = vld [vmem:[#allocation9 + $0x208] sm:$0xf]
        %v2155 = vld [vmem:[#allocation9 + $0x20c] sm:$0xf]
        %v2156 = vld [vmem:[#allocation9 + $0x210] sm:$0xf]
        %v2157 = vld [vmem:[#allocation9 + $0x214] sm:$0xf]
        %v2158 = vld [vmem:[#allocation9 + $0x218] sm:$0xf]
        %v2159 = vld [vmem:[#allocation9 + $0x21c] sm:$0xf]
        %v2160 = vld [vmem:[#allocation9 + $0x220] sm:$0xf]
        %v2161 = vld [vmem:[#allocation9 + $0x224] sm:$0xf]
        %v2162 = vld [vmem:[#allocation9 + $0x228] sm:$0xf]
        %v2163 = vld [vmem:[#allocation9 + $0x22c] sm:$0xf]
        %v2164 = vld [vmem:[#allocation9 + $0x230] sm:$0xf]
        %v2165 = vld [vmem:[#allocation9 + $0x234] sm:$0xf]
        %v2166 = vld [vmem:[#allocation9 + $0x238] sm:$0xf]
        %v2167 = vld [vmem:[#allocation9 + $0x23c] sm:$0xf]
        %v2168 = vld [vmem:[%s6] sm:$0x1]
        %v2170 = vlaneseq
        %v2171 = vshrl.u32 %v2170, 7
        %v2172 = vsub.s32 0, %v2171
        %v2173 = vrot.slane %v2168, %v2172
        %v2319 = vunpack.c.l.b16 %v2024
        %v2320 = vunpack.c.l.b16 %v2025
        %v2321 = vunpack.c.l.b16 %v2026
        %v2322 = vunpack.c.l.b16 %v2027
        %v2323 = vunpack.c.l.b16 %v2028
        %v2324 = vunpack.c.l.b16 %v2029
        %v2325 = vunpack.c.l.b16 %v2030
        %v2326 = vunpack.c.l.b16 %v2031
        %v2327 = vunpack.c.l.b16 %v2032
        %v2328 = vunpack.c.l.b16 %v2033
        %v2329 = vunpack.c.l.b16 %v2034
        %v2330 = vunpack.c.l.b16 %v2035
        %v2331 = vunpack.c.l.b16 %v2036
        %v2332 = vunpack.c.l.b16 %v2037
        %v2333 = vunpack.c.l.b16 %v2038
        %v2334 = vunpack.c.l.b16 %v2039
        %v2335 = vunpack.c.l.b16 %v2040
        %v2336 = vunpack.c.l.b16 %v2041
        %v2337 = vunpack.c.l.b16 %v2042
        %v2338 = vunpack.c.l.b16 %v2043
        %v2339 = vunpack.c.l.b16 %v2044
        %v2340 = vunpack.c.l.b16 %v2045
        %v2341 = vunpack.c.l.b16 %v2046
        %v2342 = vunpack.c.l.b16 %v2047
        %v2343 = vunpack.c.l.b16 %v2048
        %v2344 = vunpack.c.l.b16 %v2049
        %v2345 = vunpack.c.l.b16 %v2050
        %v2346 = vunpack.c.l.b16 %v2051
        %v2347 = vunpack.c.l.b16 %v2052
        %v2348 = vunpack.c.l.b16 %v2053
        %v2349 = vunpack.c.l.b16 %v2054
        %v2350 = vunpack.c.l.b16 %v2055
        %v2351 = vunpack.c.l.b16 %v2056
        %v2352 = vunpack.c.l.b16 %v2057
        %v2353 = vunpack.c.l.b16 %v2058
        %v2354 = vunpack.c.l.b16 %v2059
        %v2355 = vunpack.c.l.b16 %v2060
        %v2356 = vunpack.c.l.b16 %v2061
        %v2357 = vunpack.c.l.b16 %v2062
        %v2358 = vunpack.c.l.b16 %v2063
        %v2359 = vunpack.c.l.b16 %v2064
        %v2360 = vunpack.c.l.b16 %v2065
        %v2361 = vunpack.c.l.b16 %v2066
        %v2362 = vunpack.c.l.b16 %v2067
        %v2363 = vunpack.c.l.b16 %v2068
        %v2364 = vunpack.c.l.b16 %v2069
        %v2365 = vunpack.c.l.b16 %v2070
        %v2366 = vunpack.c.l.b16 %v2071
        %v2367 = vunpack.c.l.b16 %v2072
        %v2368 = vunpack.c.l.b16 %v2073
        %v2369 = vunpack.c.l.b16 %v2074
        %v2370 = vunpack.c.l.b16 %v2075
        %v2371 = vunpack.c.l.b16 %v2076
        %v2372 = vunpack.c.l.b16 %v2077
        %v2373 = vunpack.c.l.b16 %v2078
        %v2374 = vunpack.c.l.b16 %v2079
        %v2375 = vunpack.c.l.b16 %v2080
        %v2376 = vunpack.c.l.b16 %v2081
        %v2377 = vunpack.c.l.b16 %v2082
        %v2378 = vunpack.c.l.b16 %v2083
        %v2379 = vunpack.c.l.b16 %v2084
        %v2380 = vunpack.c.l.b16 %v2085
        %v2381 = vunpack.c.l.b16 %v2086
        %v2382 = vunpack.c.l.b16 %v2087
        %v2383 = vunpack.c.l.b16 %v2088
        %v2384 = vunpack.c.l.b16 %v2089
        %v2385 = vunpack.c.l.b16 %v2090
        %v2386 = vunpack.c.l.b16 %v2091
        %v2387 = vunpack.c.l.b16 %v2092
        %v2388 = vunpack.c.l.b16 %v2093
        %v2389 = vunpack.c.l.b16 %v2094
        %v2390 = vunpack.c.l.b16 %v2095
        %v2391 = vunpack.c.l.b16 %v2096
        %v2392 = vunpack.c.l.b16 %v2097
        %v2393 = vunpack.c.l.b16 %v2098
        %v2394 = vunpack.c.l.b16 %v2099
        %v2395 = vunpack.c.l.b16 %v2100
        %v2396 = vunpack.c.l.b16 %v2101
        %v2397 = vunpack.c.l.b16 %v2102
        %v2398 = vunpack.c.l.b16 %v2103
        %v2399 = vunpack.c.l.b16 %v2104
        %v2400 = vunpack.c.l.b16 %v2105
        %v2401 = vunpack.c.l.b16 %v2106
        %v2402 = vunpack.c.l.b16 %v2107
        %v2403 = vunpack.c.l.b16 %v2108
        %v2404 = vunpack.c.l.b16 %v2109
        %v2405 = vunpack.c.l.b16 %v2110
        %v2406 = vunpack.c.l.b16 %v2111
        %v2407 = vunpack.c.l.b16 %v2112
        %v2408 = vunpack.c.l.b16 %v2113
        %v2409 = vunpack.c.l.b16 %v2114
        %v2410 = vunpack.c.l.b16 %v2115
        %v2411 = vunpack.c.l.b16 %v2116
        %v2412 = vunpack.c.l.b16 %v2117
        %v2413 = vunpack.c.l.b16 %v2118
        %v2414 = vunpack.c.l.b16 %v2119
        %v2415 = vunpack.c.l.b16 %v2120
        %v2416 = vunpack.c.l.b16 %v2121
        %v2417 = vunpack.c.l.b16 %v2122
        %v2418 = vunpack.c.l.b16 %v2123
        %v2419 = vunpack.c.l.b16 %v2124
        %v2420 = vunpack.c.l.b16 %v2125
        %v2421 = vunpack.c.l.b16 %v2126
        %v2422 = vunpack.c.l.b16 %v2127
        %v2423 = vunpack.c.l.b16 %v2128
        %v2424 = vunpack.c.l.b16 %v2129
        %v2425 = vunpack.c.l.b16 %v2130
        %v2426 = vunpack.c.l.b16 %v2131
        %v2427 = vunpack.c.l.b16 %v2132
        %v2428 = vunpack.c.l.b16 %v2133
        %v2429 = vunpack.c.l.b16 %v2134
        %v2430 = vunpack.c.l.b16 %v2135
        %v2431 = vunpack.c.l.b16 %v2136
        %v2432 = vunpack.c.l.b16 %v2137
        %v2433 = vunpack.c.l.b16 %v2138
        %v2434 = vunpack.c.l.b16 %v2139
        %v2435 = vunpack.c.l.b16 %v2140
        %v2436 = vunpack.c.l.b16 %v2141
        %v2437 = vunpack.c.l.b16 %v2142
        %v2438 = vunpack.c.l.b16 %v2143
        %v2439 = vunpack.c.l.b16 %v2144
        %v2440 = vunpack.c.l.b16 %v2145
        %v2441 = vunpack.c.l.b16 %v2146
        %v2442 = vunpack.c.l.b16 %v2147
        %v2443 = vunpack.c.l.b16 %v2148
        %v2444 = vunpack.c.l.b16 %v2149
        %v2445 = vunpack.c.l.b16 %v2150
        %v2446 = vunpack.c.l.b16 %v2151
        %v2447 = vunpack.c.l.b16 %v2152
        %v2448 = vunpack.c.l.b16 %v2153
        %v2449 = vunpack.c.l.b16 %v2154
        %v2450 = vunpack.c.l.b16 %v2155
        %v2451 = vunpack.c.l.b16 %v2156
        %v2452 = vunpack.c.l.b16 %v2157
        %v2453 = vunpack.c.l.b16 %v2158
        %v2454 = vunpack.c.l.b16 %v2159
        %v2455 = vunpack.c.l.b16 %v2160
        %v2456 = vunpack.c.l.b16 %v2161
        %v2457 = vunpack.c.l.b16 %v2162
        %v2458 = vunpack.c.l.b16 %v2163
        %v2459 = vunpack.c.l.b16 %v2164
        %v2460 = vunpack.c.l.b16 %v2165
        %v2461 = vunpack.c.l.b16 %v2166
        %v2462 = vunpack.c.l.b16 %v2167
        %v2463 = vpack.c.b16 %v2320, %v2319
        %v2464 = vpack.c.b16 %v2322, %v2321
        %v2465 = vpack.c.b16 %v2324, %v2323
        %v2466 = vpack.c.b16 %v2326, %v2325
        %v2467 = vpack.c.b16 %v2328, %v2327
        %v2468 = vpack.c.b16 %v2330, %v2329
        %v2469 = vpack.c.b16 %v2332, %v2331
        %v2470 = vpack.c.b16 %v2334, %v2333
        %v2471 = vpack.c.b16 %v2336, %v2335
        %v2472 = vpack.c.b16 %v2338, %v2337
        %v2473 = vpack.c.b16 %v2340, %v2339
        %v2474 = vpack.c.b16 %v2342, %v2341
        %v2475 = vpack.c.b16 %v2344, %v2343
        %v2476 = vpack.c.b16 %v2346, %v2345
        %v2477 = vpack.c.b16 %v2348, %v2347
        %v2478 = vpack.c.b16 %v2350, %v2349
        %v2479 = vpack.c.b16 %v2352, %v2351
        %v2480 = vpack.c.b16 %v2354, %v2353
        %v2481 = vpack.c.b16 %v2356, %v2355
        %v2482 = vpack.c.b16 %v2358, %v2357
        %v2483 = vpack.c.b16 %v2360, %v2359
        %v2484 = vpack.c.b16 %v2362, %v2361
        %v2485 = vpack.c.b16 %v2364, %v2363
        %v2486 = vpack.c.b16 %v2366, %v2365
        %v2487 = vpack.c.b16 %v2368, %v2367
        %v2488 = vpack.c.b16 %v2370, %v2369
        %v2489 = vpack.c.b16 %v2372, %v2371
        %v2490 = vpack.c.b16 %v2374, %v2373
        %v2491 = vpack.c.b16 %v2376, %v2375
        %v2492 = vpack.c.b16 %v2378, %v2377
        %v2493 = vpack.c.b16 %v2380, %v2379
        %v2494 = vpack.c.b16 %v2382, %v2381
        %v2495 = vpack.c.b16 %v2384, %v2383
        %v2496 = vpack.c.b16 %v2386, %v2385
        %v2497 = vpack.c.b16 %v2388, %v2387
        %v2498 = vpack.c.b16 %v2390, %v2389
        %v2499 = vpack.c.b16 %v2392, %v2391
        %v2500 = vpack.c.b16 %v2394, %v2393
        %v2501 = vpack.c.b16 %v2396, %v2395
        %v2502 = vpack.c.b16 %v2398, %v2397
        %v2503 = vpack.c.b16 %v2400, %v2399
        %v2504 = vpack.c.b16 %v2402, %v2401
        %v2505 = vpack.c.b16 %v2404, %v2403
        %v2506 = vpack.c.b16 %v2406, %v2405
        %v2507 = vpack.c.b16 %v2408, %v2407
        %v2508 = vpack.c.b16 %v2410, %v2409
        %v2509 = vpack.c.b16 %v2412, %v2411
        %v2510 = vpack.c.b16 %v2414, %v2413
        %v2511 = vpack.c.b16 %v2416, %v2415
        %v2512 = vpack.c.b16 %v2418, %v2417
        %v2513 = vpack.c.b16 %v2420, %v2419
        %v2514 = vpack.c.b16 %v2422, %v2421
        %v2515 = vpack.c.b16 %v2424, %v2423
        %v2516 = vpack.c.b16 %v2426, %v2425
        %v2517 = vpack.c.b16 %v2428, %v2427
        %v2518 = vpack.c.b16 %v2430, %v2429
        %v2519 = vpack.c.b16 %v2432, %v2431
        %v2520 = vpack.c.b16 %v2434, %v2433
        %v2521 = vpack.c.b16 %v2436, %v2435
        %v2522 = vpack.c.b16 %v2438, %v2437
        %v2523 = vpack.c.b16 %v2440, %v2439
        %v2524 = vpack.c.b16 %v2442, %v2441
        %v2525 = vpack.c.b16 %v2444, %v2443
        %v2526 = vpack.c.b16 %v2446, %v2445
        %v2527 = vpack.c.b16 %v2448, %v2447
        %v2528 = vpack.c.b16 %v2450, %v2449
        %v2529 = vpack.c.b16 %v2452, %v2451
        %v2530 = vpack.c.b16 %v2454, %v2453
        %v2531 = vpack.c.b16 %v2456, %v2455
        %v2532 = vpack.c.b16 %v2458, %v2457
        %v2533 = vpack.c.b16 %v2460, %v2459
        %v2534 = vpack.c.b16 %v2462, %v2461
        %2607 = vmatprep.subr.bf16.mxu0 0
        %2608 = vmatpush1.bf16.msra.mxu0 %v2463
        %2609 = vmatprep.subr.bf16.mxu0 0
        %2610 = vmatpush1.bf16.msra.mxu0 %v2464
        %2611 = vmatprep.subr.bf16.mxu0 0
        %2612 = vmatpush1.bf16.msra.mxu0 %v2465
        %2613 = vmatprep.subr.bf16.mxu0 0
        %2614 = vmatpush1.bf16.msra.mxu0 %v2466
        %2615 = vmatprep.subr.bf16.mxu0 0
        %2616 = vmatpush1.bf16.msra.mxu0 %v2467
        %2617 = vmatprep.subr.bf16.mxu0 0
        %2618 = vmatpush1.bf16.msra.mxu0 %v2468
        %2619 = vmatprep.subr.bf16.mxu0 0
        %2620 = vmatpush1.bf16.msra.mxu0 %v2469
        %2621 = vmatprep.subr.bf16.mxu0 0
        %2622 = vmatpush1.bf16.msra.mxu0 %v2470
        %2623 = vmatprep.subr.bf16.mxu0 0
        %2624 = vmatpush1.bf16.msra.mxu0 %v2471
        %2625 = vmatprep.subr.bf16.mxu0 0
        %2626 = vmatpush1.bf16.msra.mxu0 %v2472
        %2627 = vmatprep.subr.bf16.mxu0 0
        %2628 = vmatpush1.bf16.msra.mxu0 %v2473
        %2629 = vmatprep.subr.bf16.mxu0 0
        %2630 = vmatpush1.bf16.msra.mxu0 %v2474
        %2631 = vmatprep.subr.bf16.mxu0 0
        %2632 = vmatpush1.bf16.msra.mxu0 %v2475
        %2633 = vmatprep.subr.bf16.mxu0 0
        %2634 = vmatpush1.bf16.msra.mxu0 %v2476
        %2635 = vmatprep.subr.bf16.mxu0 0
        %2636 = vmatpush1.bf16.msra.mxu0 %v2477
        %2637 = vmatprep.subr.bf16.mxu0 0
        %2638 = vmatpush1.bf16.msra.mxu0 %v2478
        %2639 = vmatprep.mubr.bf16.mxu0 %v1410
        %2640 = vmatmul.mubr.bf16.gmra.mrb[0].mxu0 %v1358
        %v2641 = vpop.f32.mrb[0].mxu0
        %v2642 = vadd.f32 %v2173, %v2641
        %v2643 = vpop.f32.mrb[0].mxu0
        %v2644 = vpop.f32.mrb[0].mxu0
        %v2645 = vadd.f32 %v2173, %v2644
        %v2646 = vpop.f32.mrb[0].mxu0
        %2647 = vmatprep.mubr.bf16.mxu0 %v1422
        %2648 = vmatmul.mubr.bf16.gmra.mrb[0].mxu0 %v1359
        %v2649 = vpop.f32.mrb[0].mxu0
        %v2650 = vadd.f32 %v2173, %v2649
        %v2651 = vpop.f32.mrb[0].mxu0
        %v2652 = vpop.f32.mrb[0].mxu0
        %v2653 = vadd.f32 %v2173, %v2652
        %v2654 = vpop.f32.mrb[0].mxu0
        %2655 = vmatprep.mubr.bf16.mxu0 %v1434
        %2656 = vmatmul.mubr.bf16.gmra.mrb[0].mxu0 %v1360
        %v2657 = vpop.f32.mrb[0].mxu0
        %v2658 = vadd.f32 %v2173, %v2657
        %v2659 = vpop.f32.mrb[0].mxu0
        %v2660 = vpop.f32.mrb[0].mxu0
        %v2661 = vadd.f32 %v2173, %v2660
        %v2662 = vpop.f32.mrb[0].mxu0
        %2663 = vmatprep.mubr.bf16.mxu0 %v1446
        %2664 = vmatmul.mubr.bf16.gmra.mrb[0].mxu0 %v1361
        %v2665 = vpop.f32.mrb[0].mxu0
        %v2666 = vadd.f32 %v2173, %v2665
        %v2667 = vpop.f32.mrb[0].mxu0
        %v2668 = vpop.f32.mrb[0].mxu0
        %v2669 = vadd.f32 %v2173, %v2668
        %v2670 = vpop.f32.mrb[0].mxu0
        %2671 = vmatprep.mubr.bf16.mxu0 %v1458
        %2672 = vmatmul.mubr.bf16.gmra.mrb[0].mxu0 %v1362
        %v2673 = vpop.f32.mrb[0].mxu0
        %v2674 = vadd.f32 %v2173, %v2673
        %v2675 = vpop.f32.mrb[0].mxu0
        %v2676 = vpop.f32.mrb[0].mxu0
        %v2677 = vadd.f32 %v2173, %v2676
        %v2678 = vpop.f32.mrb[0].mxu0
        %2679 = vmatprep.mubr.bf16.mxu0 %v1470
        %2680 = vmatmul.mubr.bf16.gmra.mrb[0].mxu0 %v1363
        %v2681 = vpop.f32.mrb[0].mxu0
        %v2682 = vadd.f32 %v2173, %v2681
        %v2683 = vpop.f32.mrb[0].mxu0
        %v2684 = vpop.f32.mrb[0].mxu0
        %v2685 = vadd.f32 %v2173, %v2684
        %v2686 = vpop.f32.mrb[0].mxu0
        %2687 = vmatprep.mubr.bf16.mxu0 %v1482
        %2688 = vmatmul.mubr.bf16.gmra.mrb[0].mxu0 %v1364
        %v2689 = vpop.f32.mrb[0].mxu0
        %v2690 = vadd.f32 %v2173, %v2689
        %v2691 = vpop.f32.mrb[0].mxu0
        %v2692 = vpop.f32.mrb[0].mxu0
        %v2693 = vadd.f32 %v2173, %v2692
        %v2694 = vpop.f32.mrb[0].mxu0
        %2695 = vmatprep.mubr.bf16.mxu0 %v1494
        %2696 = vmatmul.mubr.bf16.gmra.mrb[0].mxu0 %v1365
        %v2697 = vpop.f32.mrb[0].mxu0
        %v2698 = vadd.f32 %v2173, %v2697
        %v2699 = vpop.f32.mrb[0].mxu0
        %v2700 = vpop.f32.mrb[0].mxu0
        %v2701 = vadd.f32 %v2173, %v2700
        %v2702 = vpop.f32.mrb[0].mxu0
        %2703 = vdwg.mxu0
        %2704 = vmatprep.subr.bf16.mxu0 0
        %2705 = vmatpush1.bf16.msra.mxu0 %v2479
        %2706 = vmatprep.subr.bf16.mxu0 0
        %2707 = vmatpush1.bf16.msra.mxu0 %v2480
        %2708 = vmatprep.subr.bf16.mxu0 0
        %2709 = vmatpush1.bf16.msra.mxu0 %v2481
        %2710 = vmatprep.subr.bf16.mxu0 0
        %2711 = vmatpush1.bf16.msra.mxu0 %v2482
        %2712 = vmatprep.subr.bf16.mxu0 0
        %2713 = vmatpush1.bf16.msra.mxu0 %v2483
        %2714 = vmatprep.subr.bf16.mxu0 0
        %2715 = vmatpush1.bf16.msra.mxu0 %v2484
        %2716 = vmatprep.subr.bf16.mxu0 0
        %2717 = vmatpush1.bf16.msra.mxu0 %v2485
        %2718 = vmatprep.subr.bf16.mxu0 0
        %2719 = vmatpush1.bf16.msra.mxu0 %v2486
        %2720 = vmatprep.subr.bf16.mxu0 0
        %2721 = vmatpush1.bf16.msra.mxu0 %v2487
        %2722 = vmatprep.subr.bf16.mxu0 0
        %2723 = vmatpush1.bf16.msra.mxu0 %v2488
        %2724 = vmatprep.subr.bf16.mxu0 0
        %2725 = vmatpush1.bf16.msra.mxu0 %v2489
        %2726 = vmatprep.subr.bf16.mxu0 0
        %2727 = vmatpush1.bf16.msra.mxu0 %v2490
        %2728 = vmatprep.subr.bf16.mxu0 0
        %2729 = vmatpush1.bf16.msra.mxu0 %v2491
        %2730 = vmatprep.subr.bf16.mxu0 0
        %2731 = vmatpush1.bf16.msra.mxu0 %v2492
        %2732 = vmatprep.subr.bf16.mxu0 0
        %2733 = vmatpush1.bf16.msra.mxu0 %v2493
        %2734 = vmatprep.subr.bf16.mxu0 0
        %2735 = vmatpush1.bf16.msra.mxu0 %v2494
        %2736 = vmatprep.mubr.bf16.mxu0 %v1592
        %2737 = vmatmul.mubr.bf16.gmra.mrb[0].mxu0 %v1530
        %v2738 = vpop.f32.mrb[0].mxu0
        %v2739 = vadd.f32 %v2642, %v2738
        %v2740 = vpop.f32.mrb[0].mxu0
        %v2741 = vpop.f32.mrb[0].mxu0
        %v2742 = vadd.f32 %v2645, %v2741
        %v2743 = vpop.f32.mrb[0].mxu0
        %2744 = vmatprep.mubr.bf16.mxu0 %v1593
        %2745 = vmatmul.mubr.bf16.gmra.mrb[0].mxu0 %v1533
        %v2746 = vpop.f32.mrb[0].mxu0
        %v2747 = vadd.f32 %v2650, %v2746
        %v2748 = vpop.f32.mrb[0].mxu0
        %v2749 = vpop.f32.mrb[0].mxu0
        %v2750 = vadd.f32 %v2653, %v2749
        %v2751 = vpop.f32.mrb[0].mxu0
        %2752 = vmatprep.mubr.bf16.mxu0 %v1594
        %2753 = vmatmul.mubr.bf16.gmra.mrb[0].mxu0 %v1536
        %v2754 = vpop.f32.mrb[0].mxu0
        %v2755 = vadd.f32 %v2658, %v2754
        %v2756 = vpop.f32.mrb[0].mxu0
        %v2757 = vpop.f32.mrb[0].mxu0
        %v2758 = vadd.f32 %v2661, %v2757
        %v2759 = vpop.f32.mrb[0].mxu0
        %2760 = vmatprep.mubr.bf16.mxu0 %v1595
        %2761 = vmatmul.mubr.bf16.gmra.mrb[0].mxu0 %v1539
        %v2762 = vpop.f32.mrb[0].mxu0
        %v2763 = vadd.f32 %v2666, %v2762
        %v2764 = vpop.f32.mrb[0].mxu0
        %v2765 = vpop.f32.mrb[0].mxu0
        %v2766 = vadd.f32 %v2669, %v2765
        %v2767 = vpop.f32.mrb[0].mxu0
        %2768 = vmatprep.mubr.bf16.mxu0 %v1596
        %2769 = vmatmul.mubr.bf16.gmra.mrb[0].mxu0 %v1542
        %v2770 = vpop.f32.mrb[0].mxu0
        %v2771 = vadd.f32 %v2674, %v2770
        %v2772 = vpop.f32.mrb[0].mxu0
        %v2773 = vpop.f32.mrb[0].mxu0
        %v2774 = vadd.f32 %v2677, %v2773
        %v2775 = vpop.f32.mrb[0].mxu0
        %2776 = vmatprep.mubr.bf16.mxu0 %v1597
        %2777 = vmatmul.mubr.bf16.gmra.mrb[0].mxu0 %v1545
        %v2778 = vpop.f32.mrb[0].mxu0
        %v2779 = vadd.f32 %v2682, %v2778
        %v2780 = vpop.f32.mrb[0].mxu0
        %v2781 = vpop.f32.mrb[0].mxu0
        %v2782 = vadd.f32 %v2685, %v2781
        %v2783 = vpop.f32.mrb[0].mxu0
        %2784 = vmatprep.mubr.bf16.mxu0 %v1598
        %2785 = vmatmul.mubr.bf16.gmra.mrb[0].mxu0 %v1548
        %v2786 = vpop.f32.mrb[0].mxu0
        %v2787 = vadd.f32 %v2690, %v2786
        %v2788 = vpop.f32.mrb[0].mxu0
        %v2789 = vpop.f32.mrb[0].mxu0
        %v2790 = vadd.f32 %v2693, %v2789
        %v2791 = vpop.f32.mrb[0].mxu0
        %2792 = vmatprep.mubr.bf16.mxu0 %v1599
        %2793 = vmatmul.mubr.bf16.gmra.mrb[0].mxu0 %v1551
        %v2794 = vpop.f32.mrb[0].mxu0
        %v2795 = vadd.f32 %v2698, %v2794
        %v2796 = vpop.f32.mrb[0].mxu0
        %v2797 = vpop.f32.mrb[0].mxu0
        %v2798 = vadd.f32 %v2701, %v2797
        %v2799 = vpop.f32.mrb[0].mxu0
        %2800 = vdwg.mxu0
        %2801 = vmatprep.subr.bf16.mxu0 0
        %2802 = vmatpush1.bf16.msra.mxu0 %v2495
        %2803 = vmatprep.subr.bf16.mxu0 0
        %2804 = vmatpush1.bf16.msra.mxu0 %v2496
        %2805 = vmatprep.subr.bf16.mxu0 0
        %2806 = vmatpush1.bf16.msra.mxu0 %v2497
        %2807 = vmatprep.subr.bf16.mxu0 0
        %2808 = vmatpush1.bf16.msra.mxu0 %v2498
        %2809 = vmatprep.subr.bf16.mxu0 0
        %2810 = vmatpush1.bf16.msra.mxu0 %v2499
        %2811 = vmatprep.subr.bf16.mxu0 0
        %2812 = vmatpush1.bf16.msra.mxu0 %v2500
        %2813 = vmatprep.subr.bf16.mxu0 0
        %2814 = vmatpush1.bf16.msra.mxu0 %v2501
        %2815 = vmatprep.subr.bf16.mxu0 0
        %2816 = vmatpush1.bf16.msra.mxu0 %v2502
        %2817 = vmatprep.subr.bf16.mxu0 0
        %2818 = vmatpush1.bf16.msra.mxu0 %v2503
        %2819 = vmatprep.subr.bf16.mxu0 0
        %2820 = vmatpush1.bf16.msra.mxu0 %v2504
        %2821 = vmatprep.subr.bf16.mxu0 0
        %2822 = vmatpush1.bf16.msra.mxu0 %v2505
        %2823 = vmatprep.subr.bf16.mxu0 0
        %2824 = vmatpush1.bf16.msra.mxu0 %v2506
        %2825 = vmatprep.subr.bf16.mxu0 0
        %2826 = vmatpush1.bf16.msra.mxu0 %v2507
        %2827 = vmatprep.subr.bf16.mxu0 0
        %2828 = vmatpush1.bf16.msra.mxu0 %v2508
        %2829 = vmatprep.subr.bf16.mxu0 0
        %2830 = vmatpush1.bf16.msra.mxu0 %v2509
        %2831 = vmatprep.subr.bf16.mxu0 0
        %2832 = vmatpush1.bf16.msra.mxu0 %v2510
        %2833 = vmatprep.mubr.bf16.mxu0 %v1762
        %2834 = vmatmul.mubr.bf16.gmra.mrb[0].mxu0 %v1643
        %v2835 = vpop.f32.mrb[0].mxu0
        %v2836 = vadd.f32 %v2739, %v2835
        %v2837 = vpop.f32.mrb[0].mxu0
        %v2838 = vpop.f32.mrb[0].mxu0
        %v2839 = vadd.f32 %v2742, %v2838
        %v2840 = vpop.f32.mrb[0].mxu0
        %2841 = vmatprep.mubr.bf16.mxu0 %v1765
        %2842 = vmatmul.mubr.bf16.gmra.mrb[0].mxu0 %v1655
        %v2843 = vpop.f32.mrb[0].mxu0
        %v2844 = vadd.f32 %v2747, %v2843
        %v2845 = vpop.f32.mrb[0].mxu0
        %v2846 = vpop.f32.mrb[0].mxu0
        %v2847 = vadd.f32 %v2750, %v2846
        %v2848 = vpop.f32.mrb[0].mxu0
        %2849 = vmatprep.mubr.bf16.mxu0 %v1768
        %2850 = vmatmul.mubr.bf16.gmra.mrb[0].mxu0 %v1667
        %v2851 = vpop.f32.mrb[0].mxu0
        %v2852 = vadd.f32 %v2755, %v2851
        %v2853 = vpop.f32.mrb[0].mxu0
        %v2854 = vpop.f32.mrb[0].mxu0
        %v2855 = vadd.f32 %v2758, %v2854
        %v2856 = vpop.f32.mrb[0].mxu0
        %2857 = vmatprep.mubr.bf16.mxu0 %v1771
        %2858 = vmatmul.mubr.bf16.gmra.mrb[0].mxu0 %v1679
        %v2859 = vpop.f32.mrb[0].mxu0
        %v2860 = vadd.f32 %v2763, %v2859
        %v2861 = vpop.f32.mrb[0].mxu0
        %v2862 = vpop.f32.mrb[0].mxu0
        %v2863 = vadd.f32 %v2766, %v2862
        %v2864 = vpop.f32.mrb[0].mxu0
        %2865 = vmatprep.mubr.bf16.mxu0 %v1774
        %2866 = vmatmul.mubr.bf16.gmra.mrb[0].mxu0 %v1691
        %v2867 = vpop.f32.mrb[0].mxu0
        %v2868 = vadd.f32 %v2771, %v2867
        %v2869 = vpop.f32.mrb[0].mxu0
        %v2870 = vpop.f32.mrb[0].mxu0
        %v2871 = vadd.f32 %v2774, %v2870
        %v2872 = vpop.f32.mrb[0].mxu0
        %2873 = vmatprep.mubr.bf16.mxu0 %v1777
        %2874 = vmatmul.mubr.bf16.gmra.mrb[0].mxu0 %v1703
        %v2875 = vpop.f32.mrb[0].mxu0
        %v2876 = vadd.f32 %v2779, %v2875
        %v2877 = vpop.f32.mrb[0].mxu0
        %v2878 = vpop.f32.mrb[0].mxu0
        %v2879 = vadd.f32 %v2782, %v2878
        %v2880 = vpop.f32.mrb[0].mxu0
        %2881 = vmatprep.mubr.bf16.mxu0 %v1780
        %2882 = vmatmul.mubr.bf16.gmra.mrb[0].mxu0 %v1715
        %v2883 = vpop.f32.mrb[0].mxu0
        %v2884 = vadd.f32 %v2787, %v2883
        %v2885 = vpop.f32.mrb[0].mxu0
        %v2886 = vpop.f32.mrb[0].mxu0
        %v2887 = vadd.f32 %v2790, %v2886
        %v2888 = vpop.f32.mrb[0].mxu0
        %2889 = vmatprep.mubr.bf16.mxu0 %v1783
        %2890 = vmatmul.mubr.bf16.gmra.mrb[0].mxu0 %v1727
        %v2891 = vpop.f32.mrb[0].mxu0
        %v2892 = vadd.f32 %v2795, %v2891
        %v2893 = vpop.f32.mrb[0].mxu0
        %v2894 = vpop.f32.mrb[0].mxu0
        %v2895 = vadd.f32 %v2798, %v2894
        %v2896 = vpop.f32.mrb[0].mxu0
        %2897 = vdwg.mxu0
        %2898 = vmatprep.subr.bf16.mxu0 0
        %2899 = vmatpush1.bf16.msra.mxu0 %v2511
        %2900 = vmatprep.subr.bf16.mxu0 0
        %2901 = vmatpush1.bf16.msra.mxu0 %v2512
        %2902 = vmatprep.subr.bf16.mxu0 0
        %2903 = vmatpush1.bf16.msra.mxu0 %v2513
        %2904 = vmatprep.subr.bf16.mxu0 0
        %2905 = vmatpush1.bf16.msra.mxu0 %v2514
        %2906 = vmatprep.subr.bf16.mxu0 0
        %2907 = vmatpush1.bf16.msra.mxu0 %v2515
        %2908 = vmatprep.subr.bf16.mxu0 0
        %2909 = vmatpush1.bf16.msra.mxu0 %v2516
        %2910 = vmatprep.subr.bf16.mxu0 0
        %2911 = vmatpush1.bf16.msra.mxu0 %v2517
        %2912 = vmatprep.subr.bf16.mxu0 0
        %2913 = vmatpush1.bf16.msra.mxu0 %v2518
        %2914 = vmatprep.subr.bf16.mxu0 0
        %2915 = vmatpush1.bf16.msra.mxu0 %v2519
        %2916 = vmatprep.subr.bf16.mxu0 0
        %2917 = vmatpush1.bf16.msra.mxu0 %v2520
        %2918 = vmatprep.subr.bf16.mxu0 0
        %2919 = vmatpush1.bf16.msra.mxu0 %v2521
        %2920 = vmatprep.subr.bf16.mxu0 0
        %2921 = vmatpush1.bf16.msra.mxu0 %v2522
        %2922 = vmatprep.subr.bf16.mxu0 0
        %2923 = vmatpush1.bf16.msra.mxu0 %v2523
        %2924 = vmatprep.subr.bf16.mxu0 0
        %2925 = vmatpush1.bf16.msra.mxu0 %v2524
        %2926 = vmatprep.subr.bf16.mxu0 0
        %2927 = vmatpush1.bf16.msra.mxu0 %v2525
        %2928 = vmatprep.subr.bf16.mxu0 0
        %2929 = vmatpush1.bf16.msra.mxu0 %v2526
        %2930 = vmatprep.mubr.bf16.mxu0 %v1875
        %2931 = vmatmul.mubr.bf16.gmra.mrb[0].mxu0 %v1824
        %v2932 = vpop.f32.mrb[0].mxu0
        %v2933 = vadd.f32 %v2836, %v2932
        %v2934 = vpop.f32.mrb[0].mxu0
        %v2935 = vpop.f32.mrb[0].mxu0
        %v2936 = vadd.f32 %v2839, %v2935
        %v2937 = vpop.f32.mrb[0].mxu0
        %2938 = vmatprep.mubr.bf16.mxu0 %v1887
        %2939 = vmatmul.mubr.bf16.gmra.mrb[0].mxu0 %v1825
        %v2940 = vpop.f32.mrb[0].mxu0
        %v2941 = vadd.f32 %v2844, %v2940
        %v2942 = vpop.f32.mrb[0].mxu0
        %v2943 = vpop.f32.mrb[0].mxu0
        %v2944 = vadd.f32 %v2847, %v2943
        %v2945 = vpop.f32.mrb[0].mxu0
        %2946 = vmatprep.mubr.bf16.mxu0 %v1899
        %2947 = vmatmul.mubr.bf16.gmra.mrb[0].mxu0 %v1826
        %v2948 = vpop.f32.mrb[0].mxu0
        %v2949 = vadd.f32 %v2852, %v2948
        %v2950 = vpop.f32.mrb[0].mxu0
        %v2951 = vpop.f32.mrb[0].mxu0
        %v2952 = vadd.f32 %v2855, %v2951
        %v2953 = vpop.f32.mrb[0].mxu0
        %2954 = vmatprep.mubr.bf16.mxu0 %v1911
        %2955 = vmatmul.mubr.bf16.gmra.mrb[0].mxu0 %v1827
        %v2956 = vpop.f32.mrb[0].mxu0
        %v2957 = vadd.f32 %v2860, %v2956
        %v2958 = vpop.f32.mrb[0].mxu0
        %v2959 = vpop.f32.mrb[0].mxu0
        %v2960 = vadd.f32 %v2863, %v2959
        %v2961 = vpop.f32.mrb[0].mxu0
        %2962 = vmatprep.mubr.bf16.mxu0 %v1923
        %2963 = vmatmul.mubr.bf16.gmra.mrb[0].mxu0 %v1828
        %v2964 = vpop.f32.mrb[0].mxu0
        %v2965 = vadd.f32 %v2868, %v2964
        %v2966 = vpop.f32.mrb[0].mxu0
        %v2967 = vpop.f32.mrb[0].mxu0
        %v2968 = vadd.f32 %v2871, %v2967
        %v2969 = vpop.f32.mrb[0].mxu0
        %2970 = vmatprep.mubr.bf16.mxu0 %v1935
        %2971 = vmatmul.mubr.bf16.gmra.mrb[0].mxu0 %v1829
        %v2972 = vpop.f32.mrb[0].mxu0
        %v2973 = vadd.f32 %v2876, %v2972
        %v2974 = vpop.f32.mrb[0].mxu0
        %v2975 = vpop.f32.mrb[0].mxu0
        %v2976 = vadd.f32 %v2879, %v2975
        %v2977 = vpop.f32.mrb[0].mxu0
        %2978 = vmatprep.mubr.bf16.mxu0 %v1947
        %2979 = vmatmul.mubr.bf16.gmra.mrb[0].mxu0 %v1830
        %v2980 = vpop.f32.mrb[0].mxu0
        %v2981 = vadd.f32 %v2884, %v2980
        %v2982 = vpop.f32.mrb[0].mxu0
        %v2983 = vpop.f32.mrb[0].mxu0
        %v2984 = vadd.f32 %v2887, %v2983
        %v2985 = vpop.f32.mrb[0].mxu0
        %2986 = vmatprep.mubr.bf16.mxu0 %v1959
        %2987 = vmatmul.mubr.bf16.gmra.mrb[0].mxu0 %v1831
        %v2988 = vpop.f32.mrb[0].mxu0
        %v2989 = vadd.f32 %v2892, %v2988
        %v2990 = vpop.f32.mrb[0].mxu0
        %v2991 = vpop.f32.mrb[0].mxu0
        %v2992 = vadd.f32 %v2895, %v2991
        %v2993 = vpop.f32.mrb[0].mxu0
        %2994 = vdwg.mxu0
        %2995 = vmatprep.subr.bf16.mxu0 0
        %2996 = vmatpush1.bf16.msra.mxu0 %v2527
        %2997 = vmatprep.subr.bf16.mxu0 0
        %2998 = vmatpush1.bf16.msra.mxu0 %v2528
        %2999 = vmatprep.subr.bf16.mxu0 0
        %3000 = vmatpush1.bf16.msra.mxu0 %v2529
        %3001 = vmatprep.subr.bf16.mxu0 0
        %3002 = vmatpush1.bf16.msra.mxu0 %v2530
        %3003 = vmatprep.subr.bf16.mxu0 0
        %3004 = vmatpush1.bf16.msra.mxu0 %v2531
        %3005 = vmatprep.subr.bf16.mxu0 0
        %3006 = vmatpush1.bf16.msra.mxu0 %v2532
        %3007 = vmatprep.subr.bf16.mxu0 0
        %3008 = vmatpush1.bf16.msra.mxu0 %v2533
        %3009 = vmatprep.subr.bf16.mxu0 0
        %3010 = vmatpush1.bf16.msra.mxu0 %v2534
        %3011 = vmatprep.subr.bf16.mxu0 0
        %3012 = vmatpush1.bf16.msra.mxu0 0
        %3013 = vmatprep.subr.bf16.mxu0 0
        %3014 = vmatpush1.bf16.msra.mxu0 0
        %3015 = vmatprep.subr.bf16.mxu0 0
        %3016 = vmatpush1.bf16.msra.mxu0 0
        %3017 = vmatprep.subr.bf16.mxu0 0
        %3018 = vmatpush1.bf16.msra.mxu0 0
        %3019 = vmatprep.subr.bf16.mxu0 0
        %3020 = vmatpush1.bf16.msra.mxu0 0
        %3021 = vmatprep.subr.bf16.mxu0 0
        %3022 = vmatpush1.bf16.msra.mxu0 0
        %3023 = vmatprep.subr.bf16.mxu0 0
        %3024 = vmatpush1.bf16.msra.mxu0 0
        %3025 = vmatprep.subr.bf16.mxu0 0
        %3026 = vmatpush1.bf16.msra.mxu0 0
        %3027 = vmatprep.mubr.bf16.mxu0 0
        %3028 = vmatmul.mubr.bf16.gmra.mrb[0].mxu0 %v1994
        %v3029 = vpop.f32.mrb[0].mxu0
        %v3030 = vadd.f32 %v2933, %v3029
        %v3031 = vpop.f32.mrb[0].mxu0
        %v3032 = vpop.f32.mrb[0].mxu0
        %v3033 = vadd.f32 %v2936, %v3032
        %v3034 = vpop.f32.mrb[0].mxu0
        %3035 = vmatprep.mubr.bf16.mxu0 0
        %3036 = vmatmul.mubr.bf16.gmra.mrb[0].mxu0 %v1997
        %v3037 = vpop.f32.mrb[0].mxu0
        %v3038 = vadd.f32 %v2941, %v3037
        %v3039 = vpop.f32.mrb[0].mxu0
        %v3040 = vpop.f32.mrb[0].mxu0
        %v3041 = vadd.f32 %v2944, %v3040
        %v3042 = vpop.f32.mrb[0].mxu0
        %3043 = vmatprep.mubr.bf16.mxu0 0
        %3044 = vmatmul.mubr.bf16.gmra.mrb[0].mxu0 %v2000
        %v3045 = vpop.f32.mrb[0].mxu0
        %v3046 = vadd.f32 %v2949, %v3045
        %v3047 = vpop.f32.mrb[0].mxu0
        %v3048 = vpop.f32.mrb[0].mxu0
        %v3049 = vadd.f32 %v2952, %v3048
        %v3050 = vpop.f32.mrb[0].mxu0
        %3051 = vmatprep.mubr.bf16.mxu0 0
        %3052 = vmatmul.mubr.bf16.gmra.mrb[0].mxu0 %v2003
        %v3053 = vpop.f32.mrb[0].mxu0
        %v3054 = vadd.f32 %v2957, %v3053
        %v3055 = vpop.f32.mrb[0].mxu0
        %v3056 = vpop.f32.mrb[0].mxu0
        %v3057 = vadd.f32 %v2960, %v3056
        %v3058 = vpop.f32.mrb[0].mxu0
        %3059 = vmatprep.mubr.bf16.mxu0 0
        %3060 = vmatmul.mubr.bf16.gmra.mrb[0].mxu0 %v2006
        %v3061 = vpop.f32.mrb[0].mxu0
        %v3062 = vadd.f32 %v2965, %v3061
        %v3063 = vpop.f32.mrb[0].mxu0
        %v3064 = vpop.f32.mrb[0].mxu0
        %v3065 = vadd.f32 %v2968, %v3064
        %v3066 = vpop.f32.mrb[0].mxu0
        %3067 = vmatprep.mubr.bf16.mxu0 0
        %3068 = vmatmul.mubr.bf16.gmra.mrb[0].mxu0 %v2009
        %v3069 = vpop.f32.mrb[0].mxu0
        %v3070 = vadd.f32 %v2973, %v3069
        %v3071 = vpop.f32.mrb[0].mxu0
        %v3072 = vpop.f32.mrb[0].mxu0
        %v3073 = vadd.f32 %v2976, %v3072
        %v3074 = vpop.f32.mrb[0].mxu0
        %3075 = vmatprep.mubr.bf16.mxu0 0
        %3076 = vmatmul.mubr.bf16.gmra.mrb[0].mxu0 %v2012
        %v3077 = vpop.f32.mrb[0].mxu0
        %v3078 = vadd.f32 %v2981, %v3077
        %v3079 = vpop.f32.mrb[0].mxu0
        %v3080 = vpop.f32.mrb[0].mxu0
        %v3081 = vadd.f32 %v2984, %v3080
        %v3082 = vpop.f32.mrb[0].mxu0
        %3083 = vmatprep.mubr.bf16.mxu0 0
        %3084 = vmatmul.mubr.bf16.gmra.mrb[0].mxu0 %v2015
        %v3085 = vpop.f32.mrb[0].mxu0
        %v3086 = vadd.f32 %v2989, %v3085
        %v3087 = vpop.f32.mrb[0].mxu0
        %v3088 = vpop.f32.mrb[0].mxu0
        %v3089 = vadd.f32 %v2992, %v3088
        %v3090 = vpop.f32.mrb[0].mxu0
        %3091 = vdwg.mxu0
        %v3092 = vmax.f32 %v3030, 0.0
        %v3093 = vmax.f32 %v3033, 0.0
        %v3094 = vmax.f32 %v3038, 0.0
        %v3095 = vmax.f32 %v3041, 0.0
        %v3096 = vmax.f32 %v3046, 0.0
        %v3097 = vmax.f32 %v3049, 0.0
        %v3098 = vmax.f32 %v3054, 0.0
        %v3099 = vmax.f32 %v3057, 0.0
        %v3100 = vmax.f32 %v3062, 0.0
        %v3101 = vmax.f32 %v3065, 0.0
        %v3102 = vmax.f32 %v3070, 0.0
        %v3103 = vmax.f32 %v3073, 0.0
        %v3104 = vmax.f32 %v3078, 0.0
        %v3105 = vmax.f32 %v3081, 0.0
        %v3106 = vmax.f32 %v3086, 0.0
        %v3107 = vmax.f32 %v3089, 0.0
        %3108 = vst [vmem:[%s354 + $0x8] sm:$0xff] %v3092
        %3109 = vst [vmem:[%s354 + $0x18] sm:$0xff] %v3093
        %3110 = vst [vmem:[%s354 + $0x28] sm:$0xff] %v3094
        %3111 = vst [vmem:[%s354 + $0x38] sm:$0xff] %v3095
        %3112 = vst [vmem:[%s354 + $0x48] sm:$0xff] %v3096
        %3113 = vst [vmem:[%s354 + $0x58] sm:$0xff] %v3097
        %3114 = vst [vmem:[%s354 + $0x68] sm:$0xff] %v3098
        %3115 = vst [vmem:[%s354 + $0x78] sm:$0xff] %v3099
        %3116 = vst [vmem:[%s354 + $0x88] sm:$0xff] %v3100
        %3117 = vst [vmem:[%s354 + $0x98] sm:$0xff] %v3101
        %3118 = vst [vmem:[%s354 + $0xa8] sm:$0xff] %v3102
        %3119 = vst [vmem:[%s354 + $0xb8] sm:$0xff] %v3103
        %3120 = vst [vmem:[%s354 + $0xc8] sm:$0xff] %v3104
        %3121 = vst [vmem:[%s354 + $0xd8] sm:$0xff] %v3105
        %3122 = vst [vmem:[%s354 + $0xe8] sm:$0xff] %v3106
        %3123 = vst [vmem:[%s354 + $0xf8] sm:$0xff] %v3107
        %s3124 = sand.u32 %s200, 1
        %s3125 = scalar_lea.sflag [#allocation5], %s3124
        %s3126 = sand.u32 %s200, 1
        %s3127 = smul.addr %s3126, 256
        %s3128 = scalar_lea.vmem [#allocation11], %s3127
        // Predicated region
        $region73: #{tpu_custom_call.1} parent=47 // pred_check
          %p3129 = pneg %p210
        $region74: #{tpu_custom_call.1} parent=47 // pred_check_branch
          %3131 = sbr.rel (%p3129) target = $region76
        $region75: #{tpu_custom_call.1} parent=47 // pred_region
          %s3132 = smul.u32 16, %s31
          %s3134 = ssub.s32 4096, 4096
          %3135 = vsyncadd %s3125, %s3134
          %s3136 = smul.addr %s3132, 2
          %s3137 = smul.addr %s30, 64
          %s3138 = sadd.s32 %s3136, %s3137
          %s3139 = smul.addr %s3138, 128
          %s3140 = scalar_lea.hbm %s7, %s3139
          %s3141 = sshll.u32 %s3128, 4
          %s3142 = int_to_ptr.vmem [resolvable:$true] %s3141
          %3147 = dma.vmem_to_hbm [thread:$0]  %s3142, 4096, %s3140, %s3125, 256, 256, 16
        $region76: #{tpu_custom_call.1} parent=47 // pred_fallthru
          _
      $region48: #{tpu_custom_call.1} parent=5 // pred_fallthru
        _
      %p3148 = scmp.le.s32.totalorder 2, %s21
      // Predicated region
      $region77: #{tpu_custom_call.1} parent=5 // pred_check
        %p3149 = pneg %p3148
      $region78: #{tpu_custom_call.1} parent=5 // pred_check_branch
        %3151 = sbr.rel (%p3149) target = $region80
      $region79: #{tpu_custom_call.1} parent=5 // pred_region
        %s3152 = ssub.s32 %s21, 2
        // Predicated region
        $region81: #{tpu_custom_call.1} parent=79 // pred_check
          %p3153 = pneg %p216
        $region82: #{tpu_custom_call.1} parent=79 // pred_check_branch
          %3155 = sbr.rel (%p3153) target = $region84
        $region83: #{tpu_custom_call.1} parent=79 // pred_region
          %s3156 = sand.u32 %s201, 1
          %s3157 = scalar_lea.sflag [#allocation5], %s3156
          %s3158 = sand.u32 %s201, 1
          %s3159 = smul.addr %s3158, 256
          %s3160 = scalar_lea.vmem [#allocation11], %s3159
          %3161 = dma.done %s3157, 4096
        $region84: #{tpu_custom_call.1} parent=79 // pred_fallthru
          _
      $region80: #{tpu_custom_call.1} parent=5 // pred_fallthru
        _
    $region6: #{tpu_custom_call.1} parent=1 // loop_footer
      %s25 = sadd.s32 1, %s21
    $region7: #{tpu_custom_call.1} parent=1 // loop_footer_branch
      %20 = sbr.rel target = $region3
    $region8: #{tpu_custom_call.1} parent=1 // loop_exit
      _
    %3162 = vsyncpa [#allocation4], 1
    %s3163 = scalar_lea.sflag [#allocation4], 1
    %3164 = vsyncpa %s3163, 1
    %3165 = vsyncpa [#allocation7], 1
    %3166 = vsyncpa [#allocation10], 1
    %3167 = vsyncpa [#allocation5], 1
    %s3168 = scalar_lea.sflag [#allocation5], 1
    %3169 = vsyncpa %s3168, 1

</llo_original>
